<compile_context>
chip_gen: v5e
topology: v5e:2x2
jax: 0.10.0
libtpu: 0.0.40
codegen_flags: <defaults>
</compile_context>

<pallas_src>
import jax
import jax.numpy as jnp
import numpy as np
from jax import lax
from jax.experimental import pallas as pl
from jax.experimental.pallas import tpu as pltpu

KW = 7          # both convs are (1, 7)
C1 = 32         # conv channels
DENSE = 128     # dense_1 / dense_2 width


def _round_up(v, m):
    return ((v + m - 1) // m) * m


# --------------------- stage 1: conv2d_1 + ReLU + pool1 ----------------------

def make_stage1_kernel(hr, out_rows, r3):
    """hr = H * 3*Q rows per pool-tap, out_rows = H1 * 3*Q, r3 = 3*Q."""

    def kernel(a_ref, w_ref, b_ref, o_ref):
        # a_ref: (3*hr, 8) bf16 im2col rows ordered (jj, h, r, q); k padded 7->8
        # conv1 for every pool tap with ONE MXU matmul (f32 accumulation).
        z = jnp.dot(a_ref[...], w_ref[...], preferred_element_type=jnp.float32)
        # W-pool (window 3, stride 3): max over the 3 taps jj (leading slices).
        m = jnp.maximum(jnp.maximum(z[0:hr], z[hr:2 * hr]), z[2 * hr:3 * hr])
        # H-pool (window 4, stride 1): max over 4 h-shifted contiguous slices.
        out = m[0:out_rows]
        for i in range(1, 4):
            out = jnp.maximum(out, m[i * r3:i * r3 + out_rows])
        # bias + ReLU commute with max (both monotone), applied once post-pool.
        out = jnp.maximum(out + b_ref[...], 0.0)
        o_ref[...] = out.astype(jnp.bfloat16)

    return kernel


def _stage1(x3, w1, b1, h1_out, q):
    """conv2d_1 + ReLU + max_pool2d((4,3),(1,3)); output phase-split along W."""
    n, h, w = x3.shape
    r3 = 3 * q
    hr = h * r3
    out_rows = h1_out * r3

    # Wrapper-side im2col of the 1-channel input: row (jj, h, r, q) holds the 7
    # conv taps of conv1 at width position 3*(3q+r)+jj, i.e. pool-window tap jj
    # of pooled column w' = 3q+r (phase-split by r = w' mod 3 for stage 2).
    jj = jnp.arange(3).reshape(3, 1, 1, 1)
    r_ = jnp.arange(3).reshape(1, 3, 1, 1)
    q_ = jnp.arange(q).reshape(1, 1, q, 1)
    k_ = jnp.arange(KW).reshape(1, 1, 1, KW)
    w_idx = jnp.clip(9 * q_ + 3 * r_ + jj + k_, 0, w - 1)        # (3,3,Q,7)
    cols = x3[:, :, w_idx]                                       # (N,H,3,3,Q,7)
    cols = jnp.moveaxis(cols, 2, 1)                              # (N,3,H,3,Q,7)
    a = cols.reshape(n, 3 * hr, KW)
    a = jnp.pad(a, ((0, 0), (0, 0), (0, 1))).astype(jnp.bfloat16)  # K: 7 -> 8

    w1p = jnp.pad(w1, ((0, 1), (0, 0))).astype(jnp.bfloat16)       # (8, 32)
    b1r = b1.reshape(1, C1).astype(jnp.float32)

    return pl.pallas_call(
        make_stage1_kernel(hr, out_rows, r3),
        out_shape=jax.ShapeDtypeStruct((n, out_rows, C1), jnp.bfloat16),
        grid=(n,),
        in_specs=[
            pl.BlockSpec((None, 3 * hr, 8), lambda i: (i, 0, 0)),
            pl.BlockSpec((8, C1), lambda i: (0, 0)),
            pl.BlockSpec((1, C1), lambda i: (0, 0)),
        ],
        out_specs=pl.BlockSpec((None, out_rows, C1), lambda i: (i, 0, 0)),
        compiler_params=pltpu.CompilerParams(dimension_semantics=("parallel",)),
    )(a, w1p, b1r)


# --------------------- stage 2: conv2d_2 + ReLU + pool2 ----------------------

def make_stage2_kernel(w2p):
    def kernel(p_ref, w_ref, b_ref, o_ref):
        # p_ref: (3, Q, 32) bf16, phase-split pooled conv1 activations of one
        #        (n, h') stripe:  p_ref[r, q, :] == P1[n, h', 3*q + r, :].
        # Pool2-phase j needs conv2 at w = 3*w''+j; its tap k reads P1 column
        # 3*w''+j+k == p_ref[(j+k)%3, (j+k)//3 + w'', :]  (contiguous slice).
        wk = [w_ref[k] for k in range(KW)]                       # 7 x (32, 32)

        def conv_phase(j):
            acc = jnp.zeros((w2p, C1), jnp.float32)
            for k in range(KW):
                m = j + k
                tap = p_ref[m % 3, pl.ds(m // 3, w2p), :]         # (W2P, 32)
                acc = acc + jnp.dot(tap, wk[k],
                                    preferred_element_type=jnp.float32)
            return acc

        s = conv_phase(0)
        s = jnp.maximum(s, conv_phase(1))
        s = jnp.maximum(s, conv_phase(2))
        o_ref[...] = jnp.maximum(s + b_ref[...], 0.0).astype(jnp.bfloat16)

    return kernel


def _stage2(p1s, w2, b2, w2p):
    """conv2d_2 + ReLU + max_pool2d((1,3),(1,3)); grid over (N, H1)."""
    n, h1, _, q, _ = p1s.shape
    w2b = w2.astype(jnp.bfloat16)                    # (7, 32, 32) [k, cin, cout]
    b2r = b2.reshape(1, C1).astype(jnp.float32)
    return pl.pallas_call(
        make_stage2_kernel(w2p),
        out_shape=jax.ShapeDtypeStruct((n, h1, w2p, C1), jnp.bfloat16),
        grid=(n, h1),
        in_specs=[
            pl.BlockSpec((None, None, 3, q, C1), lambda i, j: (i, j, 0, 0, 0)),
            pl.BlockSpec((KW, C1, C1), lambda i, j: (0, 0, 0)),
            pl.BlockSpec((1, C1), lambda i, j: (0, 0)),
        ],
        out_specs=pl.BlockSpec((None, None, w2p, C1), lambda i, j: (i, j, 0, 0)),
        compiler_params=pltpu.CompilerParams(
            dimension_semantics=("parallel", "parallel")),
    )(p1s, w2b, b2r)


# ------------- stage 3: dense_1 (K-tiled) + dense_2 + dense_3 ----------------

def dense_chain_kernel(x_ref, w1_ref, b1_ref, w2_ref, b2_ref, w3_ref, b3_ref,
                       o_ref, acc_ref):
    @pl.when(pl.program_id(1) == 0)
    def _init():
        acc_ref[...] = jnp.zeros_like(acc_ref)

    # K-tiled accumulation of dense_1 (bf16 operands, f32 accumulator).
    acc_ref[...] += jnp.dot(x_ref[...], w1_ref[...],
                            preferred_element_type=jnp.float32)

    @pl.when(pl.program_id(1) == pl.num_programs(1) - 1)
    def _finalize():
        h1 = jnp.maximum(acc_ref[...] + b1_ref[...], 0.0)          # relu(dense_1)
        h2 = jnp.dot(h1.astype(jnp.bfloat16), w2_ref[...],
                     preferred_element_type=jnp.float32)
        h2 = jnp.maximum(h2 + b2_ref[...], 0.0)                    # relu(dense_2)
        # TODO(synk): Dropout(0.5) is identity at inference; training-mode
        # masking would use pltpu.prng_seed / pltpu.prng_random_bits.
        h3 = jnp.sum(h2 * w3_ref[...], axis=-1, keepdims=True)     # dense_3 (out=1)
        o_ref[...] = jnp.maximum(h3 + b3_ref[...], 0.0)            # final relu


def _dense_chain(flat, wd1, bd1, wd2, bd2, wd3, bd3):
    m, d = flat.shape
    tm = min(128, _round_up(m, 8))
    tk = 512 if d > 512 else 128            # K-tile: fits VMEM even at 120736
    mp = _round_up(m, tm)
    kp = _round_up(d, tk)

    x = jnp.pad(flat.astype(jnp.bfloat16), ((0, mp - m), (0, kp - d)))
    w1 = jnp.pad(wd1.astype(jnp.bfloat16), ((0, kp - d), (0, 0)))
    b1 = bd1.reshape(1, DENSE).astype(jnp.float32)
    w2 = wd2.astype(jnp.bfloat16)
    b2 = bd2.reshape(1, DENSE).astype(jnp.float32)
    w3 = wd3.reshape(1, DENSE).astype(jnp.float32)   # out-dim 1 -> VPU reduce
    b3 = bd3.reshape(1, 1).astype(jnp.float32)

    out = pl.pallas_call(
        dense_chain_kernel,
        out_shape=jax.ShapeDtypeStruct((mp, 1), jnp.float32),
        grid=(mp // tm, kp // tk),
        in_specs=[
            pl.BlockSpec((tm, tk), lambda i, k: (i, k)),
            pl.BlockSpec((tk, DENSE), lambda i, k: (k, 0)),
            pl.BlockSpec((1, DENSE), lambda i, k: (0, 0)),
            pl.BlockSpec((DENSE, DENSE), lambda i, k: (0, 0)),
            pl.BlockSpec((1, DENSE), lambda i, k: (0, 0)),
            pl.BlockSpec((1, DENSE), lambda i, k: (0, 0)),
            pl.BlockSpec((1, 1), lambda i, k: (0, 0)),
        ],
        out_specs=pl.BlockSpec((tm, 1), lambda i, k: (i, 0)),
        scratch_shapes=[pltpu.VMEM((tm, DENSE), jnp.float32)],
        compiler_params=pltpu.CompilerParams(
            dimension_semantics=("parallel", "arbitrary")),
    )(x, w1, b1, w2, b2, w3, b3)
    return out[:m]


# --------------------------------- forward -----------------------------------

def cnn_forward(x, params):
    """x: (N, 1, H, W) float32 (NCHW like the torch module). Returns (N, 1) f32."""
    n, cin, h, w = x.shape
    assert cin == 1
    x3 = x[:, 0]                                     # (N, H, W)

    w1c = w - (KW - 1)                               # conv1 output width
    h1 = h - 3                                       # pool1 out height (win 4, stride 1)
    w1p = (w1c - 3) // 3 + 1                         # pool1 output width
    w2c = w1p - (KW - 1)                             # conv2 output width
    w2p = (w2c - 3) // 3 + 1                         # pool2 output width
    q = _round_up(w2p + 2, 8)                        # phase length (8-aligned)

    p1 = _stage1(x3, params["w1"], params["b1"], h1, q)      # (N, H1*3*Q, 32) bf16
    p1 = p1.reshape(n, h1, 3, q, C1)                          # free HBM reshape

    p2 = _stage2(p1, params["w2"], params["b2"], w2p)         # (N, H1, W2P, 32)

    # torch permute(0,2,3,1).view(-1, D): p2 is already NHWC -> plain reshape.
    flat = p2.reshape(n, h1 * w2p * C1)

    return _dense_chain(flat, params["wd1"], params["bd1"],
                        params["wd2"], params["bd2"],
                        params["wd3"], params["bd3"])


def init_params(key, d_flat):
    ks = jax.random.split(key, 10)
    s = lambda k, shape, scale: scale * jax.random.normal(k, shape, jnp.float32)
    return {
        # conv2d_1: torch weight (32,1,1,7)  -> [kw, c_out]
        "w1": s(ks[0], (KW, C1), 0.2),
        "b1": s(ks[1], (C1,), 0.1),
        # conv2d_2: torch weight (32,32,1,7) -> [kw, c_in, c_out]
        "w2": s(ks[2], (KW, C1, C1), 0.05),
        "b2": s(ks[3], (C1,), 0.1),
        # dense layers stored as (in, out) = torch weight.T
        "wd1": s(ks[4], (d_flat, DENSE), 0.05),
        "bd1": s(ks[5], (DENSE,), 0.1),
        "wd2": s(ks[6], (DENSE, DENSE), 0.05),
        "bd2": s(ks[7], (DENSE,), 0.1),
        "wd3": s(ks[8], (DENSE, 1), 0.05),
        "bd3": s(ks[9], (1,), 0.1),
    }


# --------------------------- pure-XLA f32 reference ---------------------------

def _max_pool_nhwc(x, window, strides):
    return lax.reduce_window(
        x, -jnp.inf, lax.max,
        (1, window[0], window[1], 1), (1, strides[0], strides[1], 1), "VALID")


def cnn_reference(x, params):
    x3 = x[:, 0]
    n, h, w = x3.shape
    w1c = w - (KW - 1)
    c1 = jnp.zeros((n, h, w1c, C1), jnp.float32)
    for k in range(KW):
        c1 = c1 + x3[:, :, k:k + w1c, None] * params["w1"][k][None, None, None, :]
    c1 = jnp.maximum(c1 + params["b1"], 0.0)
    p1 = _max_pool_nhwc(c1, (4, 3), (1, 3))

    h1, w1p = p1.shape[1], p1.shape[2]
    w2c = w1p - (KW - 1)
    c2 = jnp.zeros((n, h1, w2c, C1), jnp.float32)
    for k in range(KW):
        c2 = c2 + jnp.einsum("nhwi,io->nhwo", p1[:, :, k:k + w2c, :], params["w2"][k])
    c2 = jnp.maximum(c2 + params["b2"], 0.0)
    p2 = _max_pool_nhwc(c2, (1, 3), (1, 3))

    flat = p2.reshape(n, -1)
    d1 = jnp.maximum(flat @ params["wd1"] + params["bd1"], 0.0)
    d2 = jnp.maximum(d1 @ params["wd2"] + params["bd2"], 0.0)
    return jnp.maximum(d2 @ params["wd3"] + params["bd3"], 0.0)


if __name__ == "__main__":
    # Small stand-in for the audio spectrogram input (N, 1, H, W).
    N, H, W = 2, 8, 49
    W1 = W - (KW - 1)             # 43 after conv2d_1
    H1 = H - 3                    # 5  after pool (4,3)/(1,3)
    W1P = (W1 - 3) // 3 + 1       # 14
    W2 = W1P - (KW - 1)           # 8  after conv2d_2
    W2P = (W2 - 3) // 3 + 1       # 2  after pool (1,3)/(1,3)
    D_FLAT = H1 * W2P * C1        # 320 here
    # TODO(synk): the reference dense_1 is Linear(120736, 128) for the full-size
    # audio input; its input dim is scaled to D_FLAT for this small test shape.

    key = jax.random.PRNGKey(0)
    kx, kp = jax.random.split(key)
    x = jax.random.normal(kx, (N, 1, H, W), jnp.float32)
    params = init_params(kp, D_FLAT)

    out = jax.jit(cnn_forward)(x, params)
    out = jax.block_until_ready(out)
    assert out.shape == (N, 1) and out.dtype == jnp.float32

    # Numerics check against a pure-XLA f32 reference (kernels use bf16 MXU
    # operands with f32 accumulation/epilogues, hence the tolerance).
    ref = jax.jit(cnn_reference)(x, params)
    ref = jax.block_until_ready(ref)
    np.testing.assert_allclose(np.asarray(out), np.asarray(ref), rtol=5e-2, atol=5e-2)
    print("KERNEL_OK")
</pallas_src>

<mosaic_0001>
module attributes {stable_mosaic.version = 11 : i64} {
  func.func @kernel(%arg0: i32, %arg1: memref<1x576x8xbf16, #tpu.memory_space<vmem>>, %arg2: memref<8x32xbf16, #tpu.memory_space<vmem>>, %arg3: memref<1x32xf32, #tpu.memory_space<vmem>>, %arg4: memref<1x120x32xbf16, #tpu.memory_space<vmem>>) attributes {dimension_semantics = [#tpu.dimension_semantics<parallel>], iteration_bounds = array<i64: 2>, scalar_prefetch = 0 : i64, scratch_operands = 0 : i64, tpu.core_type = #tpu.core_type<tc>, window_params = [{transform_indices = @transform_0, window_bounds = array<i64: 1, 576, 8>}, {pipeline_mode = #tpu.pipeline_mode<synchronous>, transform_indices = @transform_1, window_bounds = array<i64: 8, 32>}, {pipeline_mode = #tpu.pipeline_mode<synchronous>, transform_indices = @transform_2, window_bounds = array<i64: 1, 32>}, {transform_indices = @transform_3, window_bounds = array<i64: 1, 120, 32>}]} {
    %c0 = arith.constant 0 : index
    %c0_0 = arith.constant 0 : index
    %c0_1 = arith.constant 0 : index
    %0 = vector.load %arg1[%c0, %c0_0, %c0_1] : memref<1x576x8xbf16, #tpu.memory_space<vmem>>, vector<1x576x8xbf16>
    %1 = vector.shape_cast %0 : vector<1x576x8xbf16> to vector<576x8xbf16>
    %c0_2 = arith.constant 0 : index
    %c0_3 = arith.constant 0 : index
    %2 = vector.load %arg2[%c0_2, %c0_3] : memref<8x32xbf16, #tpu.memory_space<vmem>>, vector<8x32xbf16>
    %cst = arith.constant dense<0.000000e+00> : vector<576x32xf32>
    %3 = tpu.matmul %1, %2, %cst {dimension_numbers = #tpu.dot_dimension_numbers<[1], [0], [0], [1], [0, 0, 1, 1], [], []>} : vector<576x8xbf16>, vector<8x32xbf16>, vector<576x32xf32> -> vector<576x32xf32>
    %4 = vector.extract_strided_slice %3 {offsets = [0, 0], sizes = [192, 32], strides = [1, 1]} : vector<576x32xf32> to vector<192x32xf32>
    %5 = vector.extract_strided_slice %3 {offsets = [192, 0], sizes = [192, 32], strides = [1, 1]} : vector<576x32xf32> to vector<192x32xf32>
    %6 = arith.maximumf %4, %5 : vector<192x32xf32>
    %7 = vector.extract_strided_slice %3 {offsets = [384, 0], sizes = [192, 32], strides = [1, 1]} : vector<576x32xf32> to vector<192x32xf32>
    %8 = arith.maximumf %6, %7 : vector<192x32xf32>
    %9 = vector.extract_strided_slice %8 {offsets = [0, 0], sizes = [120, 32], strides = [1, 1]} : vector<192x32xf32> to vector<120x32xf32>
    %10 = vector.extract_strided_slice %8 {offsets = [24, 0], sizes = [120, 32], strides = [1, 1]} : vector<192x32xf32> to vector<120x32xf32>
    %11 = arith.maximumf %9, %10 : vector<120x32xf32>
    %12 = vector.extract_strided_slice %8 {offsets = [48, 0], sizes = [120, 32], strides = [1, 1]} : vector<192x32xf32> to vector<120x32xf32>
    %13 = arith.maximumf %11, %12 : vector<120x32xf32>
    %14 = vector.extract_strided_slice %8 {offsets = [72, 0], sizes = [120, 32], strides = [1, 1]} : vector<192x32xf32> to vector<120x32xf32>
    %15 = arith.maximumf %13, %14 : vector<120x32xf32>
    %c0_4 = arith.constant 0 : index
    %c0_5 = arith.constant 0 : index
    %16 = vector.load %arg3[%c0_4, %c0_5] : memref<1x32xf32, #tpu.memory_space<vmem>>, vector<1x32xf32>
    %17 = vector.broadcast %16 : vector<1x32xf32> to vector<120x32xf32>
    %18 = arith.addf %15, %17 : vector<120x32xf32>
    %cst_6 = arith.constant 0.000000e+00 : f32
    %19 = vector.broadcast %cst_6 : f32 to vector<120x32xf32>
    %20 = arith.maximumf %18, %19 : vector<120x32xf32>
    %21 = arith.truncf %20 : vector<120x32xf32> to vector<120x32xbf16>
    %c0_7 = arith.constant 0 : index
    %c0_8 = arith.constant 0 : index
    %c0_9 = arith.constant 0 : index
    %22 = vector.load %arg4[%c0_7, %c0_8, %c0_9] : memref<1x120x32xbf16, #tpu.memory_space<vmem>>, vector<1x120x32xbf16>
    %23 = vector.shape_cast %22 : vector<1x120x32xbf16> to vector<120x32xbf16>
    %24 = vector.shape_cast %21 : vector<120x32xbf16> to vector<1x120x32xbf16>
    tpu.vector_store %arg4[%c0_7, %c0_8, %c0_9], %24 {strides = array<i32>} : memref<1x120x32xbf16, #tpu.memory_space<vmem>>, vector<1x120x32xbf16>,
    return
  }
  func.func @transform_0(%arg0: i32) -> (i32, i32, i32) {
    %c0_i32 = arith.constant 0 : i32
    %c0_i32_0 = arith.constant 0 : i32
    %c0_i32_1 = arith.constant 0 : i32
    return %arg0, %c0_i32, %c0_i32_0 : i32, i32, i32
  }
  func.func @transform_1(%arg0: i32) -> (i32, i32) {
    %c0_i32 = arith.constant 0 : i32
    %c0_i32_0 = arith.constant 0 : i32
    %c0_i32_1 = arith.constant 0 : i32
    return %c0_i32, %c0_i32_0 : i32, i32
  }
  func.func @transform_2(%arg0: i32) -> (i32, i32) {
    %c0_i32 = arith.constant 0 : i32
    %c0_i32_0 = arith.constant 0 : i32
    %c0_i32_1 = arith.constant 0 : i32
    return %c0_i32, %c0_i32_0 : i32, i32
  }
  func.func @transform_3(%arg0: i32) -> (i32, i32, i32) {
    %c0_i32 = arith.constant 0 : i32
    %c0_i32_0 = arith.constant 0 : i32
    %c0_i32_1 = arith.constant 0 : i32
    return %arg0, %c0_i32, %c0_i32_0 : i32, i32, i32
  }
}

module attributes {stable_mosaic.version = 11 : i64} {
  func.func @kernel(%arg0: i32, %arg1: i32, %arg2: memref<1x1x3x8x32xbf16, #tpu.memory_space<vmem>>, %arg3: memref<7x32x32xbf16, #tpu.memory_space<vmem>>, %arg4: memref<1x32xf32, #tpu.memory_space<vmem>>, %arg5: memref<1x1x2x32xbf16, #tpu.memory_space<vmem>>) attributes {dimension_semantics = [#tpu.dimension_semantics<parallel>, #tpu.dimension_semantics<parallel>], iteration_bounds = array<i64: 2, 5>, scalar_prefetch = 0 : i64, scratch_operands = 0 : i64, tpu.core_type = #tpu.core_type<tc>, window_params = [{transform_indices = @transform_0, window_bounds = array<i64: 1, 1, 3, 8, 32>}, {pipeline_mode = #tpu.pipeline_mode<synchronous>, transform_indices = @transform_1, window_bounds = array<i64: 7, 32, 32>}, {pipeline_mode = #tpu.pipeline_mode<synchronous>, transform_indices = @transform_2, window_bounds = array<i64: 1, 32>}, {transform_indices = @transform_3, window_bounds = array<i64: 1, 1, 2, 32>}]} {
    %c0 = arith.constant 0 : index
    %c0_0 = arith.constant 0 : index
    %c0_1 = arith.constant 0 : index
    %0 = vector.load %arg3[%c0, %c0_0, %c0_1] : memref<7x32x32xbf16, #tpu.memory_space<vmem>>, vector<1x32x32xbf16>
    %1 = vector.shape_cast %0 : vector<1x32x32xbf16> to vector<32x32xbf16>
    %c1 = arith.constant 1 : index
    %c0_2 = arith.constant 0 : index
    %c0_3 = arith.constant 0 : index
    %2 = vector.load %arg3[%c1, %c0_2, %c0_3] : memref<7x32x32xbf16, #tpu.memory_space<vmem>>, vector<1x32x32xbf16>
    %3 = vector.shape_cast %2 : vector<1x32x32xbf16> to vector<32x32xbf16>
    %c2 = arith.constant 2 : index
    %c0_4 = arith.constant 0 : index
    %c0_5 = arith.constant 0 : index
    %4 = vector.load %arg3[%c2, %c0_4, %c0_5] : memref<7x32x32xbf16, #tpu.memory_space<vmem>>, vector<1x32x32xbf16>
    %5 = vector.shape_cast %4 : vector<1x32x32xbf16> to vector<32x32xbf16>
    %c3 = arith.constant 3 : index
    %c0_6 = arith.constant 0 : index
    %c0_7 = arith.constant 0 : index
    %6 = vector.load %arg3[%c3, %c0_6, %c0_7] : memref<7x32x32xbf16, #tpu.memory_space<vmem>>, vector<1x32x32xbf16>
    %7 = vector.shape_cast %6 : vector<1x32x32xbf16> to vector<32x32xbf16>
    %c4 = arith.constant 4 : index
    %c0_8 = arith.constant 0 : index
    %c0_9 = arith.constant 0 : index
    %8 = vector.load %arg3[%c4, %c0_8, %c0_9] : memref<7x32x32xbf16, #tpu.memory_space<vmem>>, vector<1x32x32xbf16>
    %9 = vector.shape_cast %8 : vector<1x32x32xbf16> to vector<32x32xbf16>
    %c5 = arith.constant 5 : index
    %c0_10 = arith.constant 0 : index
    %c0_11 = arith.constant 0 : index
    %10 = vector.load %arg3[%c5, %c0_10, %c0_11] : memref<7x32x32xbf16, #tpu.memory_space<vmem>>, vector<1x32x32xbf16>
    %11 = vector.shape_cast %10 : vector<1x32x32xbf16> to vector<32x32xbf16>
    %c6 = arith.constant 6 : index
    %c0_12 = arith.constant 0 : index
    %c0_13 = arith.constant 0 : index
    %12 = vector.load %arg3[%c6, %c0_12, %c0_13] : memref<7x32x32xbf16, #tpu.memory_space<vmem>>, vector<1x32x32xbf16>
    %13 = vector.shape_cast %12 : vector<1x32x32xbf16> to vector<32x32xbf16>
    %cst = arith.constant 0.000000e+00 : f32
    %14 = vector.broadcast %cst : f32 to vector<2x32xf32>
    %c0_14 = arith.constant 0 : index
    %c0_15 = arith.constant 0 : index
    %c0_16 = arith.constant 0 : index
    %c0_17 = arith.constant 0 : index
    %c0_18 = arith.constant 0 : index
    %15 = vector.load %arg2[%c0_14, %c0_15, %c0_16, %c0_17, %c0_18] : memref<1x1x3x8x32xbf16, #tpu.memory_space<vmem>>, vector<1x1x1x2x32xbf16>
    %16 = vector.shape_cast %15 : vector<1x1x1x2x32xbf16> to vector<2x32xbf16>
    %cst_19 = arith.constant dense<0.000000e+00> : vector<2x32xf32>
    %17 = tpu.matmul %16, %1, %cst_19 {dimension_numbers = #tpu.dot_dimension_numbers<[1], [0], [0], [1], [0, 0, 1, 1], [], []>} : vector<2x32xbf16>, vector<32x32xbf16>, vector<2x32xf32> -> vector<2x32xf32>
    %18 = arith.addf %14, %17 : vector<2x32xf32>
    %c0_20 = arith.constant 0 : index
    %c0_21 = arith.constant 0 : index
    %c1_22 = arith.constant 1 : index
    %c0_23 = arith.constant 0 : index
    %c0_24 = arith.constant 0 : index
    %19 = vector.load %arg2[%c0_20, %c0_21, %c1_22, %c0_23, %c0_24] : memref<1x1x3x8x32xbf16, #tpu.memory_space<vmem>>, vector<1x1x1x2x32xbf16>
    %20 = vector.shape_cast %19 : vector<1x1x1x2x32xbf16> to vector<2x32xbf16>
    %cst_25 = arith.constant dense<0.000000e+00> : vector<2x32xf32>
    %21 = tpu.matmul %20, %3, %cst_25 {dimension_numbers = #tpu.dot_dimension_numbers<[1], [0], [0], [1], [0, 0, 1, 1], [], []>} : vector<2x32xbf16>, vector<32x32xbf16>, vector<2x32xf32> -> vector<2x32xf32>
    %22 = arith.addf %18, %21 : vector<2x32xf32>
    %c0_26 = arith.constant 0 : index
    %c0_27 = arith.constant 0 : index
    %c2_28 = arith.constant 2 : index
    %c0_29 = arith.constant 0 : index
    %c0_30 = arith.constant 0 : index
    %23 = vector.load %arg2[%c0_26, %c0_27, %c2_28, %c0_29, %c0_30] : memref<1x1x3x8x32xbf16, #tpu.memory_space<vmem>>, vector<1x1x1x2x32xbf16>
    %24 = vector.shape_cast %23 : vector<1x1x1x2x32xbf16> to vector<2x32xbf16>
    %cst_31 = arith.constant dense<0.000000e+00> : vector<2x32xf32>
    %25 = tpu.matmul %24, %5, %cst_31 {dimension_numbers = #tpu.dot_dimension_numbers<[1], [0], [0], [1], [0, 0, 1, 1], [], []>} : vector<2x32xbf16>, vector<32x32xbf16>, vector<2x32xf32> -> vector<2x32xf32>
    %26 = arith.addf %22, %25 : vector<2x32xf32>
    %c0_32 = arith.constant 0 : index
    %c0_33 = arith.constant 0 : index
    %c0_34 = arith.constant 0 : index
    %c1_35 = arith.constant 1 : index
    %c0_36 = arith.constant 0 : index
    %27 = vector.load %arg2[%c0_32, %c0_33, %c0_34, %c1_35, %c0_36] : memref<1x1x3x8x32xbf16, #tpu.memory_space<vmem>>, vector<1x1x1x2x32xbf16>
    %28 = vector.shape_cast %27 : vector<1x1x1x2x32xbf16> to vector<2x32xbf16>
    %cst_37 = arith.constant dense<0.000000e+00> : vector<2x32xf32>
    %29 = tpu.matmul %28, %7, %cst_37 {dimension_numbers = #tpu.dot_dimension_numbers<[1], [0], [0], [1], [0, 0, 1, 1], [], []>} : vector<2x32xbf16>, vector<32x32xbf16>, vector<2x32xf32> -> vector<2x32xf32>
    %30 = arith.addf %26, %29 : vector<2x32xf32>
    %c0_38 = arith.constant 0 : index
    %c0_39 = arith.constant 0 : index
    %c1_40 = arith.constant 1 : index
    %c1_41 = arith.constant 1 : index
    %c0_42 = arith.constant 0 : index
    %31 = vector.load %arg2[%c0_38, %c0_39, %c1_40, %c1_41, %c0_42] : memref<1x1x3x8x32xbf16, #tpu.memory_space<vmem>>, vector<1x1x1x2x32xbf16>
    %32 = vector.shape_cast %31 : vector<1x1x1x2x32xbf16> to vector<2x32xbf16>
    %cst_43 = arith.constant dense<0.000000e+00> : vector<2x32xf32>
    %33 = tpu.matmul %32, %9, %cst_43 {dimension_numbers = #tpu.dot_dimension_numbers<[1], [0], [0], [1], [0, 0, 1, 1], [], []>} : vector<2x32xbf16>, vector<32x32xbf16>, vector<2x32xf32> -> vector<2x32xf32>
    %34 = arith.addf %30, %33 : vector<2x32xf32>
    %c0_44 = arith.constant 0 : index
    %c0_45 = arith.constant 0 : index
    %c2_46 = arith.constant 2 : index
    %c1_47 = arith.constant 1 : index
    %c0_48 = arith.constant 0 : index
    %35 = vector.load %arg2[%c0_44, %c0_45, %c2_46, %c1_47, %c0_48] : memref<1x1x3x8x32xbf16, #tpu.memory_space<vmem>>, vector<1x1x1x2x32xbf16>
    %36 = vector.shape_cast %35 : vector<1x1x1x2x32xbf16> to vector<2x32xbf16>
    %cst_49 = arith.constant dense<0.000000e+00> : vector<2x32xf32>
    %37 = tpu.matmul %36, %11, %cst_49 {dimension_numbers = #tpu.dot_dimension_numbers<[1], [0], [0], [1], [0, 0, 1, 1], [], []>} : vector<2x32xbf16>, vector<32x32xbf16>, vector<2x32xf32> -> vector<2x32xf32>
    %38 = arith.addf %34, %37 : vector<2x32xf32>
    %c0_50 = arith.constant 0 : index
    %c0_51 = arith.constant 0 : index
    %c0_52 = arith.constant 0 : index
    %c2_53 = arith.constant 2 : index
    %c0_54 = arith.constant 0 : index
    %39 = vector.load %arg2[%c0_50, %c0_51, %c0_52, %c2_53, %c0_54] : memref<1x1x3x8x32xbf16, #tpu.memory_space<vmem>>, vector<1x1x1x2x32xbf16>
    %40 = vector.shape_cast %39 : vector<1x1x1x2x32xbf16> to vector<2x32xbf16>
    %cst_55 = arith.constant dense<0.000000e+00> : vector<2x32xf32>
    %41 = tpu.matmul %40, %13, %cst_55 {dimension_numbers = #tpu.dot_dimension_numbers<[1], [0], [0], [1], [0, 0, 1, 1], [], []>} : vector<2x32xbf16>, vector<32x32xbf16>, vector<2x32xf32> -> vector<2x32xf32>
    %42 = arith.addf %38, %41 : vector<2x32xf32>
    %cst_56 = arith.constant 0.000000e+00 : f32
    %43 = vector.broadcast %cst_56 : f32 to vector<2x32xf32>
    %c0_57 = arith.constant 0 : index
    %c0_58 = arith.constant 0 : index
    %c1_59 = arith.constant 1 : index
    %c0_60 = arith.constant 0 : index
    %c0_61 = arith.constant 0 : index
    %44 = vector.load %arg2[%c0_57, %c0_58, %c1_59, %c0_60, %c0_61] : memref<1x1x3x8x32xbf16, #tpu.memory_space<vmem>>, vector<1x1x1x2x32xbf16>
    %45 = vector.shape_cast %44 : vector<1x1x1x2x32xbf16> to vector<2x32xbf16>
    %cst_62 = arith.constant dense<0.000000e+00> : vector<2x32xf32>
    %46 = tpu.matmul %45, %1, %cst_62 {dimension_numbers = #tpu.dot_dimension_numbers<[1], [0], [0], [1], [0, 0, 1, 1], [], []>} : vector<2x32xbf16>, vector<32x32xbf16>, vector<2x32xf32> -> vector<2x32xf32>
    %47 = arith.addf %43, %46 : vector<2x32xf32>
    %c0_63 = arith.constant 0 : index
    %c0_64 = arith.constant 0 : index
    %c2_65 = arith.constant 2 : index
    %c0_66 = arith.constant 0 : index
    %c0_67 = arith.constant 0 : index
    %48 = vector.load %arg2[%c0_63, %c0_64, %c2_65, %c0_66, %c0_67] : memref<1x1x3x8x32xbf16, #tpu.memory_space<vmem>>, vector<1x1x1x2x32xbf16>
    %49 = vector.shape_cast %48 : vector<1x1x1x2x32xbf16> to vector<2x32xbf16>
    %cst_68 = arith.constant dense<0.000000e+00> : vector<2x32xf32>
    %50 = tpu.matmul %49, %3, %cst_68 {dimension_numbers = #tpu.dot_dimension_numbers<[1], [0], [0], [1], [0, 0, 1, 1], [], []>} : vector<2x32xbf16>, vector<32x32xbf16>, vector<2x32xf32> -> vector<2x32xf32>
    %51 = arith.addf %47, %50 : vector<2x32xf32>
    %c0_69 = arith.constant 0 : index
    %c0_70 = arith.constant 0 : index
    %c0_71 = arith.constant 0 : index
    %c1_72 = arith.constant 1 : index
    %c0_73 = arith.constant 0 : index
    %52 = vector.load %arg2[%c0_69, %c0_70, %c0_71, %c1_72, %c0_73] : memref<1x1x3x8x32xbf16, #tpu.memory_space<vmem>>, vector<1x1x1x2x32xbf16>
    %53 = vector.shape_cast %52 : vector<1x1x1x2x32xbf16> to vector<2x32xbf16>
    %cst_74 = arith.constant dense<0.000000e+00> : vector<2x32xf32>
    %54 = tpu.matmul %53, %5, %cst_74 {dimension_numbers = #tpu.dot_dimension_numbers<[1], [0], [0], [1], [0, 0, 1, 1], [], []>} : vector<2x32xbf16>, vector<32x32xbf16>, vector<2x32xf32> -> vector<2x32xf32>
    %55 = arith.addf %51, %54 : vector<2x32xf32>
    %c0_75 = arith.constant 0 : index
    %c0_76 = arith.constant 0 : index
    %c1_77 = arith.constant 1 : index
    %c1_78 = arith.constant 1 : index
    %c0_79 = arith.constant 0 : index
    %56 = vector.load %arg2[%c0_75, %c0_76, %c1_77, %c1_78, %c0_79] : memref<1x1x3x8x32xbf16, #tpu.memory_space<vmem>>, vector<1x1x1x2x32xbf16>
    %57 = vector.shape_cast %56 : vector<1x1x1x2x32xbf16> to vector<2x32xbf16>
    %cst_80 = arith.constant dense<0.000000e+00> : vector<2x32xf32>
    %58 = tpu.matmul %57, %7, %cst_80 {dimension_numbers = #tpu.dot_dimension_numbers<[1], [0], [0], [1], [0, 0, 1, 1], [], []>} : vector<2x32xbf16>, vector<32x32xbf16>, vector<2x32xf32> -> vector<2x32xf32>
    %59 = arith.addf %55, %58 : vector<2x32xf32>
    %c0_81 = arith.constant 0 : index
    %c0_82 = arith.constant 0 : index
    %c2_83 = arith.constant 2 : index
    %c1_84 = arith.constant 1 : index
    %c0_85 = arith.constant 0 : index
    %60 = vector.load %arg2[%c0_81, %c0_82, %c2_83, %c1_84, %c0_85] : memref<1x1x3x8x32xbf16, #tpu.memory_space<vmem>>, vector<1x1x1x2x32xbf16>
    %61 = vector.shape_cast %60 : vector<1x1x1x2x32xbf16> to vector<2x32xbf16>
    %cst_86 = arith.constant dense<0.000000e+00> : vector<2x32xf32>
    %62 = tpu.matmul %61, %9, %cst_86 {dimension_numbers = #tpu.dot_dimension_numbers<[1], [0], [0], [1], [0, 0, 1, 1], [], []>} : vector<2x32xbf16>, vector<32x32xbf16>, vector<2x32xf32> -> vector<2x32xf32>
    %63 = arith.addf %59, %62 : vector<2x32xf32>
    %c0_87 = arith.constant 0 : index
    %c0_88 = arith.constant 0 : index
    %c0_89 = arith.constant 0 : index
    %c2_90 = arith.constant 2 : index
    %c0_91 = arith.constant 0 : index
    %64 = vector.load %arg2[%c0_87, %c0_88, %c0_89, %c2_90, %c0_91] : memref<1x1x3x8x32xbf16, #tpu.memory_space<vmem>>, vector<1x1x1x2x32xbf16>
    %65 = vector.shape_cast %64 : vector<1x1x1x2x32xbf16> to vector<2x32xbf16>
    %cst_92 = arith.constant dense<0.000000e+00> : vector<2x32xf32>
    %66 = tpu.matmul %65, %11, %cst_92 {dimension_numbers = #tpu.dot_dimension_numbers<[1], [0], [0], [1], [0, 0, 1, 1], [], []>} : vector<2x32xbf16>, vector<32x32xbf16>, vector<2x32xf32> -> vector<2x32xf32>
    %67 = arith.addf %63, %66 : vector<2x32xf32>
    %c0_93 = arith.constant 0 : index
    %c0_94 = arith.constant 0 : index
    %c1_95 = arith.constant 1 : index
    %c2_96 = arith.constant 2 : index
    %c0_97 = arith.constant 0 : index
    %68 = vector.load %arg2[%c0_93, %c0_94, %c1_95, %c2_96, %c0_97] : memref<1x1x3x8x32xbf16, #tpu.memory_space<vmem>>, vector<1x1x1x2x32xbf16>
    %69 = vector.shape_cast %68 : vector<1x1x1x2x32xbf16> to vector<2x32xbf16>
    %cst_98 = arith.constant dense<0.000000e+00> : vector<2x32xf32>
    %70 = tpu.matmul %69, %13, %cst_98 {dimension_numbers = #tpu.dot_dimension_numbers<[1], [0], [0], [1], [0, 0, 1, 1], [], []>} : vector<2x32xbf16>, vector<32x32xbf16>, vector<2x32xf32> -> vector<2x32xf32>
    %71 = arith.addf %67, %70 : vector<2x32xf32>
    %72 = arith.maximumf %42, %71 : vector<2x32xf32>
    %cst_99 = arith.constant 0.000000e+00 : f32
    %73 = vector.broadcast %cst_99 : f32 to vector<2x32xf32>
    %c0_100 = arith.constant 0 : index
    %c0_101 = arith.constant 0 : index
    %c2_102 = arith.constant 2 : index
    %c0_103 = arith.constant 0 : index
    %c0_104 = arith.constant 0 : index
    %74 = vector.load %arg2[%c0_100, %c0_101, %c2_102, %c0_103, %c0_104] : memref<1x1x3x8x32xbf16, #tpu.memory_space<vmem>>, vector<1x1x1x2x32xbf16>
    %75 = vector.shape_cast %74 : vector<1x1x1x2x32xbf16> to vector<2x32xbf16>
    %cst_105 = arith.constant dense<0.000000e+00> : vector<2x32xf32>
    %76 = tpu.matmul %75, %1, %cst_105 {dimension_numbers = #tpu.dot_dimension_numbers<[1], [0], [0], [1], [0, 0, 1, 1], [], []>} : vector<2x32xbf16>, vector<32x32xbf16>, vector<2x32xf32> -> vector<2x32xf32>
    %77 = arith.addf %73, %76 : vector<2x32xf32>
    %c0_106 = arith.constant 0 : index
    %c0_107 = arith.constant 0 : index
    %c0_108 = arith.constant 0 : index
    %c1_109 = arith.constant 1 : index
    %c0_110 = arith.constant 0 : index
    %78 = vector.load %arg2[%c0_106, %c0_107, %c0_108, %c1_109, %c0_110] : memref<1x1x3x8x32xbf16, #tpu.memory_space<vmem>>, vector<1x1x1x2x32xbf16>
    %79 = vector.shape_cast %78 : vector<1x1x1x2x32xbf16> to vector<2x32xbf16>
    %cst_111 = arith.constant dense<0.000000e+00> : vector<2x32xf32>
    %80 = tpu.matmul %79, %3, %cst_111 {dimension_numbers = #tpu.dot_dimension_numbers<[1], [0], [0], [1], [0, 0, 1, 1], [], []>} : vector<2x32xbf16>, vector<32x32xbf16>, vector<2x32xf32> -> vector<2x32xf32>
    %81 = arith.addf %77, %80 : vector<2x32xf32>
    %c0_112 = arith.constant 0 : index
    %c0_113 = arith.constant 0 : index
    %c1_114 = arith.constant 1 : index
    %c1_115 = arith.constant 1 : index
    %c0_116 = arith.constant 0 : index
    %82 = vector.load %arg2[%c0_112, %c0_113, %c1_114, %c1_115, %c0_116] : memref<1x1x3x8x32xbf16, #tpu.memory_space<vmem>>, vector<1x1x1x2x32xbf16>
    %83 = vector.shape_cast %82 : vector<1x1x1x2x32xbf16> to vector<2x32xbf16>
    %cst_117 = arith.constant dense<0.000000e+00> : vector<2x32xf32>
    %84 = tpu.matmul %83, %5, %cst_117 {dimension_numbers = #tpu.dot_dimension_numbers<[1], [0], [0], [1], [0, 0, 1, 1], [], []>} : vector<2x32xbf16>, vector<32x32xbf16>, vector<2x32xf32> -> vector<2x32xf32>
    %85 = arith.addf %81, %84 : vector<2x32xf32>
    %c0_118 = arith.constant 0 : index
    %c0_119 = arith.constant 0 : index
    %c2_120 = arith.constant 2 : index
    %c1_121 = arith.constant 1 : index
    %c0_122 = arith.constant 0 : index
    %86 = vector.load %arg2[%c0_118, %c0_119, %c2_120, %c1_121, %c0_122] : memref<1x1x3x8x32xbf16, #tpu.memory_space<vmem>>, vector<1x1x1x2x32xbf16>
    %87 = vector.shape_cast %86 : vector<1x1x1x2x32xbf16> to vector<2x32xbf16>
    %cst_123 = arith.constant dense<0.000000e+00> : vector<2x32xf32>
    %88 = tpu.matmul %87, %7, %cst_123 {dimension_numbers = #tpu.dot_dimension_numbers<[1], [0], [0], [1], [0, 0, 1, 1], [], []>} : vector<2x32xbf16>, vector<32x32xbf16>, vector<2x32xf32> -> vector<2x32xf32>
    %89 = arith.addf %85, %88 : vector<2x32xf32>
    %c0_124 = arith.constant 0 : index
    %c0_125 = arith.constant 0 : index
    %c0_126 = arith.constant 0 : index
    %c2_127 = arith.constant 2 : index
    %c0_128 = arith.constant 0 : index
    %90 = vector.load %arg2[%c0_124, %c0_125, %c0_126, %c2_127, %c0_128] : memref<1x1x3x8x32xbf16, #tpu.memory_space<vmem>>, vector<1x1x1x2x32xbf16>
    %91 = vector.shape_cast %90 : vector<1x1x1x2x32xbf16> to vector<2x32xbf16>
    %cst_129 = arith.constant dense<0.000000e+00> : vector<2x32xf32>
    %92 = tpu.matmul %91, %9, %cst_129 {dimension_numbers = #tpu.dot_dimension_numbers<[1], [0], [0], [1], [0, 0, 1, 1], [], []>} : vector<2x32xbf16>, vector<32x32xbf16>, vector<2x32xf32> -> vector<2x32xf32>
    %93 = arith.addf %89, %92 : vector<2x32xf32>
    %c0_130 = arith.constant 0 : index
    %c0_131 = arith.constant 0 : index
    %c1_132 = arith.constant 1 : index
    %c2_133 = arith.constant 2 : index
    %c0_134 = arith.constant 0 : index
    %94 = vector.load %arg2[%c0_130, %c0_131, %c1_132, %c2_133, %c0_134] : memref<1x1x3x8x32xbf16, #tpu.memory_space<vmem>>, vector<1x1x1x2x32xbf16>
    %95 = vector.shape_cast %94 : vector<1x1x1x2x32xbf16> to vector<2x32xbf16>
    %cst_135 = arith.constant dense<0.000000e+00> : vector<2x32xf32>
    %96 = tpu.matmul %95, %11, %cst_135 {dimension_numbers = #tpu.dot_dimension_numbers<[1], [0], [0], [1], [0, 0, 1, 1], [], []>} : vector<2x32xbf16>, vector<32x32xbf16>, vector<2x32xf32> -> vector<2x32xf32>
    %97 = arith.addf %93, %96 : vector<2x32xf32>
    %c0_136 = arith.constant 0 : index
    %c0_137 = arith.constant 0 : index
    %c2_138 = arith.constant 2 : index
    %c2_139 = arith.constant 2 : index
    %c0_140 = arith.constant 0 : index
    %98 = vector.load %arg2[%c0_136, %c0_137, %c2_138, %c2_139, %c0_140] : memref<1x1x3x8x32xbf16, #tpu.memory_space<vmem>>, vector<1x1x1x2x32xbf16>
    %99 = vector.shape_cast %98 : vector<1x1x1x2x32xbf16> to vector<2x32xbf16>
    %cst_141 = arith.constant dense<0.000000e+00> : vector<2x32xf32>
    %100 = tpu.matmul %99, %13, %cst_141 {dimension_numbers = #tpu.dot_dimension_numbers<[1], [0], [0], [1], [0, 0, 1, 1], [], []>} : vector<2x32xbf16>, vector<32x32xbf16>, vector<2x32xf32> -> vector<2x32xf32>
    %101 = arith.addf %97, %100 : vector<2x32xf32>
    %102 = arith.maximumf %72, %101 : vector<2x32xf32>
    %c0_142 = arith.constant 0 : index
    %c0_143 = arith.constant 0 : index
    %103 = vector.load %arg4[%c0_142, %c0_143] : memref<1x32xf32, #tpu.memory_space<vmem>>, vector<1x32xf32>
    %104 = vector.broadcast %103 : vector<1x32xf32> to vector<2x32xf32>
    %105 = arith.addf %102, %104 : vector<2x32xf32>
    %cst_144 = arith.constant 0.000000e+00 : f32
    %106 = vector.broadcast %cst_144 : f32 to vector<2x32xf32>
    %107 = arith.maximumf %105, %106 : vector<2x32xf32>
    %108 = arith.truncf %107 : vector<2x32xf32> to vector<2x32xbf16>
    %c0_145 = arith.constant 0 : index
    %c0_146 = arith.constant 0 : index
    %c0_147 = arith.constant 0 : index
    %c0_148 = arith.constant 0 : index
    %109 = vector.load %arg5[%c0_145, %c0_146, %c0_147, %c0_148] : memref<1x1x2x32xbf16, #tpu.memory_space<vmem>>, vector<1x1x2x32xbf16>
    %110 = vector.shape_cast %109 : vector<1x1x2x32xbf16> to vector<2x32xbf16>
    %111 = vector.shape_cast %108 : vector<2x32xbf16> to vector<1x1x2x32xbf16>
    tpu.vector_store %arg5[%c0_145, %c0_146, %c0_147, %c0_148], %111 {strides = array<i32>} : memref<1x1x2x32xbf16, #tpu.memory_space<vmem>>, vector<1x1x2x32xbf16>,
    return
  }
  func.func @transform_0(%arg0: i32, %arg1: i32) -> (i32, i32, i32, i32, i32) {
    %c0_i32 = arith.constant 0 : i32
    %c0_i32_0 = arith.constant 0 : i32
    %c0_i32_1 = arith.constant 0 : i32
    %c0_i32_2 = arith.constant 0 : i32
    return %arg0, %arg1, %c0_i32, %c0_i32_0, %c0_i32_1 : i32, i32, i32, i32, i32
  }
  func.func @transform_1(%arg0: i32, %arg1: i32) -> (i32, i32, i32) {
    %c0_i32 = arith.constant 0 : i32
    %c0_i32_0 = arith.constant 0 : i32
    %c0_i32_1 = arith.constant 0 : i32
    %c0_i32_2 = arith.constant 0 : i32
    return %c0_i32, %c0_i32_0, %c0_i32_1 : i32, i32, i32
  }
  func.func @transform_2(%arg0: i32, %arg1: i32) -> (i32, i32) {
    %c0_i32 = arith.constant 0 : i32
    %c0_i32_0 = arith.constant 0 : i32
    %c0_i32_1 = arith.constant 0 : i32
    return %c0_i32, %c0_i32_0 : i32, i32
  }
  func.func @transform_3(%arg0: i32, %arg1: i32) -> (i32, i32, i32, i32) {
    %c0_i32 = arith.constant 0 : i32
    %c0_i32_0 = arith.constant 0 : i32
    %c0_i32_1 = arith.constant 0 : i32
    return %arg0, %arg1, %c0_i32, %c0_i32_0 : i32, i32, i32, i32
  }
}

module attributes {stable_mosaic.version = 11 : i64} {
  func.func @dense_chain_kernel(%arg0: i32, %arg1: i32, %arg2: memref<8x128xbf16, #tpu.memory_space<vmem>>, %arg3: memref<128x128xbf16, #tpu.memory_space<vmem>>, %arg4: memref<1x128xf32, #tpu.memory_space<vmem>>, %arg5: memref<128x128xbf16, #tpu.memory_space<vmem>>, %arg6: memref<1x128xf32, #tpu.memory_space<vmem>>, %arg7: memref<1x128xf32, #tpu.memory_space<vmem>>, %arg8: memref<1x1xf32, #tpu.memory_space<vmem>>, %arg9: memref<8x1xf32, #tpu.memory_space<vmem>>, %arg10: memref<8x128xf32, #tpu.memory_space<vmem>>) attributes {dimension_semantics = [#tpu.dimension_semantics<parallel>, #tpu.dimension_semantics<arbitrary>], iteration_bounds = array<i64: 1, 3>, scalar_prefetch = 0 : i64, scratch_operands = 1 : i64, tpu.core_type = #tpu.core_type<tc>, window_params = [{transform_indices = @transform_0, window_bounds = array<i64: 8, 128>}, {transform_indices = @transform_1, window_bounds = array<i64: 128, 128>}, {pipeline_mode = #tpu.pipeline_mode<synchronous>, transform_indices = @transform_2, window_bounds = array<i64: 1, 128>}, {pipeline_mode = #tpu.pipeline_mode<synchronous>, transform_indices = @transform_3, window_bounds = array<i64: 128, 128>}, {pipeline_mode = #tpu.pipeline_mode<synchronous>, transform_indices = @transform_4, window_bounds = array<i64: 1, 128>}, {pipeline_mode = #tpu.pipeline_mode<synchronous>, transform_indices = @transform_5, window_bounds = array<i64: 1, 128>}, {pipeline_mode = #tpu.pipeline_mode<synchronous>, transform_indices = @transform_6, window_bounds = array<i64: 1, 1>}, {transform_indices = @transform_7, window_bounds = array<i64: 8, 1>}]} {
    %c0_i32 = arith.constant 0 : i32
    %0 = arith.cmpi eq, %arg1, %c0_i32 : i32
    %1 = arith.extui %0 : i1 to i32
    %c0_i32_0 = arith.constant 0 : i32
    %2 = arith.cmpi ne, %1, %c0_i32_0 : i32
    scf.if %2 {
      %cst_9 = arith.constant 0.000000e+00 : f32
      %12 = vector.broadcast %cst_9 : f32 to vector<8x128xf32>
      %c0_10 = arith.constant 0 : index
      %c0_11 = arith.constant 0 : index
      %13 = vector.load %arg10[%c0_10, %c0_11] : memref<8x128xf32, #tpu.memory_space<vmem>>, vector<8x128xf32>
      tpu.vector_store %arg10[%c0_10, %c0_11], %12 {strides = array<i32>} : memref<8x128xf32, #tpu.memory_space<vmem>>, vector<8x128xf32>,
    } else {
    }
    %c0 = arith.constant 0 : index
    %c0_1 = arith.constant 0 : index
    %3 = vector.load %arg10[%c0, %c0_1] : memref<8x128xf32, #tpu.memory_space<vmem>>, vector<8x128xf32>
    %c0_2 = arith.constant 0 : index
    %c0_3 = arith.constant 0 : index
    %4 = vector.load %arg2[%c0_2, %c0_3] : memref<8x128xbf16, #tpu.memory_space<vmem>>, vector<8x128xbf16>
    %c0_4 = arith.constant 0 : index
    %c0_5 = arith.constant 0 : index
    %5 = vector.load %arg3[%c0_4, %c0_5] : memref<128x128xbf16, #tpu.memory_space<vmem>>, vector<128x128xbf16>
    %cst = arith.constant dense<0.000000e+00> : vector<8x128xf32>
    %6 = tpu.matmul %4, %5, %cst {dimension_numbers = #tpu.dot_dimension_numbers<[1], [0], [0], [1], [0, 0, 1, 1], [], []>} : vector<8x128xbf16>, vector<128x128xbf16>, vector<8x128xf32> -> vector<8x128xf32>
    %7 = arith.addf %3, %6 : vector<8x128xf32>
    %c0_6 = arith.constant 0 : index
    %c0_7 = arith.constant 0 : index
    %8 = vector.load %arg10[%c0_6, %c0_7] : memref<8x128xf32, #tpu.memory_space<vmem>>, vector<8x128xf32>
    tpu.vector_store %arg10[%c0_6, %c0_7], %7 {strides = array<i32>} : memref<8x128xf32, #tpu.memory_space<vmem>>, vector<8x128xf32>,
    %c2_i32 = arith.constant 2 : i32
    %9 = arith.cmpi eq, %arg1, %c2_i32 : i32
    %10 = arith.extui %9 : i1 to i32
    %c0_i32_8 = arith.constant 0 : i32
    %11 = arith.cmpi ne, %10, %c0_i32_8 : i32
    scf.if %11 {
      %c0_9 = arith.constant 0 : index
      %c0_10 = arith.constant 0 : index
      %12 = vector.load %arg10[%c0_9, %c0_10] : memref<8x128xf32, #tpu.memory_space<vmem>>, vector<8x128xf32>
      %c0_11 = arith.constant 0 : index
      %c0_12 = arith.constant 0 : index
      %13 = vector.load %arg4[%c0_11, %c0_12] : memref<1x128xf32, #tpu.memory_space<vmem>>, vector<1x128xf32>
      %14 = vector.broadcast %13 : vector<1x128xf32> to vector<8x128xf32>
      %15 = arith.addf %12, %14 : vector<8x128xf32>
      %cst_13 = arith.constant 0.000000e+00 : f32
      %16 = vector.broadcast %cst_13 : f32 to vector<8x128xf32>
      %17 = arith.maximumf %15, %16 : vector<8x128xf32>
      %18 = arith.truncf %17 : vector<8x128xf32> to vector<8x128xbf16>
      %c0_14 = arith.constant 0 : index
      %c0_15 = arith.constant 0 : index
      %19 = vector.load %arg5[%c0_14, %c0_15] : memref<128x128xbf16, #tpu.memory_space<vmem>>, vector<128x128xbf16>
      %cst_16 = arith.constant dense<0.000000e+00> : vector<8x128xf32>
      %20 = tpu.matmul %18, %19, %cst_16 {dimension_numbers = #tpu.dot_dimension_numbers<[1], [0], [0], [1], [0, 0, 1, 1], [], []>} : vector<8x128xbf16>, vector<128x128xbf16>, vector<8x128xf32> -> vector<8x128xf32>
      %c0_17 = arith.constant 0 : index
      %c0_18 = arith.constant 0 : index
      %21 = vector.load %arg6[%c0_17, %c0_18] : memref<1x128xf32, #tpu.memory_space<vmem>>, vector<1x128xf32>
      %22 = vector.broadcast %21 : vector<1x128xf32> to vector<8x128xf32>
      %23 = arith.addf %20, %22 : vector<8x128xf32>
      %cst_19 = arith.constant 0.000000e+00 : f32
      %24 = vector.broadcast %cst_19 : f32 to vector<8x128xf32>
      %25 = arith.maximumf %23, %24 : vector<8x128xf32>
      %c0_20 = arith.constant 0 : index
      %c0_21 = arith.constant 0 : index
      %26 = vector.load %arg7[%c0_20, %c0_21] : memref<1x128xf32, #tpu.memory_space<vmem>>, vector<1x128xf32>
      %27 = vector.broadcast %26 : vector<1x128xf32> to vector<8x128xf32>
      %28 = arith.mulf %25, %27 : vector<8x128xf32>
      %cst_22 = arith.constant dense<0.000000e+00> : vector<8xf32>
      %29 = vector.multi_reduction <add>, %28, %cst_22 [1] : vector<8x128xf32> to vector<8xf32>
      %30 = vector.shape_cast %29 : vector<8xf32> to vector<8x1xf32>
      %c0_23 = arith.constant 0 : index
      %c0_24 = arith.constant 0 : index
      %31 = vector.load %arg8[%c0_23, %c0_24] : memref<1x1xf32, #tpu.memory_space<vmem>>, vector<1x1xf32>
      %32 = vector.broadcast %31 : vector<1x1xf32> to vector<8x1xf32>
      %33 = arith.addf %30, %32 : vector<8x1xf32>
      %cst_25 = arith.constant 0.000000e+00 : f32
      %34 = vector.broadcast %cst_25 : f32 to vector<8x1xf32>
      %35 = arith.maximumf %33, %34 : vector<8x1xf32>
      %c0_26 = arith.constant 0 : index
      %c0_27 = arith.constant 0 : index
      %36 = vector.load %arg9[%c0_26, %c0_27] : memref<8x1xf32, #tpu.memory_space<vmem>>, vector<8x1xf32>
      tpu.vector_store %arg9[%c0_26, %c0_27], %35 {strides = array<i32>} : memref<8x1xf32, #tpu.memory_space<vmem>>, vector<8x1xf32>,
    } else {
    }
    return
  }
  func.func @transform_0(%arg0: i32, %arg1: i32) -> (i32, i32) {
    %c0_i32 = arith.constant 0 : i32
    return %arg0, %arg1 : i32, i32
  }
  func.func @transform_1(%arg0: i32, %arg1: i32) -> (i32, i32) {
    %c0_i32 = arith.constant 0 : i32
    %c0_i32_0 = arith.constant 0 : i32
    return %arg1, %c0_i32 : i32, i32
  }
  func.func @transform_2(%arg0: i32, %arg1: i32) -> (i32, i32) {
    %c0_i32 = arith.constant 0 : i32
    %c0_i32_0 = arith.constant 0 : i32
    %c0_i32_1 = arith.constant 0 : i32
    return %c0_i32, %c0_i32_0 : i32, i32
  }
  func.func @transform_3(%arg0: i32, %arg1: i32) -> (i32, i32) {
    %c0_i32 = arith.constant 0 : i32
    %c0_i32_0 = arith.constant 0 : i32
    %c0_i32_1 = arith.constant 0 : i32
    return %c0_i32, %c0_i32_0 : i32, i32
  }
  func.func @transform_4(%arg0: i32, %arg1: i32) -> (i32, i32) {
    %c0_i32 = arith.constant 0 : i32
    %c0_i32_0 = arith.constant 0 : i32
    %c0_i32_1 = arith.constant 0 : i32
    return %c0_i32, %c0_i32_0 : i32, i32
  }
  func.func @transform_5(%arg0: i32, %arg1: i32) -> (i32, i32) {
    %c0_i32 = arith.constant 0 : i32
    %c0_i32_0 = arith.constant 0 : i32
    %c0_i32_1 = arith.constant 0 : i32
    return %c0_i32, %c0_i32_0 : i32, i32
  }
  func.func @transform_6(%arg0: i32, %arg1: i32) -> (i32, i32) {
    %c0_i32 = arith.constant 0 : i32
    %c0_i32_0 = arith.constant 0 : i32
    %c0_i32_1 = arith.constant 0 : i32
    return %c0_i32, %c0_i32_0 : i32, i32
  }
  func.func @transform_7(%arg0: i32, %arg1: i32) -> (i32, i32) {
    %c0_i32 = arith.constant 0 : i32
    %c0_i32_0 = arith.constant 0 : i32
    return %arg0, %c0_i32 : i32, i32
  }
}

</mosaic_0001>

<llo_original>
// kernel: cnn_forward.3
$region0: #{cnn_forward.3}
  #allocation0 [shape = 'u32[]', space=smem, size = 0x4, offset = 0x4, fixed_abs, tag = 'smem constant byte address 0x4 - core index']
  #allocation1 [shape = 'u32[72,128]{1,0:T(1,128)}', space=vmem, size = 0x9000, scoped, tag = 'internal scratch']
  %s0 = inlined_call_operand.vmem [shape: bf16[2,576,8], index: 0, kind: input, shape index: {}]
  %s1 = inlined_call_operand.vmem [shape: bf16[8,32], index: 1, kind: input, shape index: {}]
  %s2 = inlined_call_operand.vmem [shape: f32[1,32], index: 2, kind: input, shape index: {}]
  %s3 = inlined_call_operand.vmem [shape: bf16[2,120,32], index: 3, kind: output, shape index: {}]
  %s4 = sld [smem:[#allocation0]]
  $region45: #{cnn_forward.3} parent=0
    _
  %s6 = ssub.s32 1, %s4
  %s7 = scalar_select 0, %s6, %s4
  loop: start=0, step=1, limit=4
  $region2: #{cnn_forward.3} parent=0 // loop_pre_header
    _
  $region3: #{cnn_forward.3} parent=0 // loop_header
    %s9 = sphi 0, %s13
    %p10 = scmp.ge.s32.totalorder %s9, 4
    %s19 = sphi 0, %s21
    %s22 = sphi 0, %s19
    %s23 = sphi 0, %s22
    %s39 = sphi 0, %s23
    %s43 = sphi 0, %s43
    %s45 = sphi 0, %s43
    %s46 = sphi 0, %s45
    %s60 = sphi 0, %s46
    %s64 = sphi 0, %s64
    %s66 = sphi 0, %s64
    %s67 = sphi 0, %s66
    %s81 = sphi 0, %s67
    %s87 = sphi 0, %s89
    %s90 = sphi 0, %s87
    %s91 = sphi 0, %s90
    %s107 = sphi 0, %s91
  $region4: #{cnn_forward.3} parent=0 // loop_header_branch
    %12 = sbr.rel (%p10) target = $region8
  $region5: #{cnn_forward.3} parent=0 // loop_body
    %s14 = ssub.s32 %s9, 1
    %s15 = ssub.s32 %s9, 2
    %s16 = sadd.s32 %s9, 1
    %s17 = ssub.s32 %s9, %s16
    %p18 = scmp.eq.s32.totalorder %s17, 0
    %s20 = sadd.s32 %s19, 1
    %s21 = scalar_select %p18, %s19, %s20
    %p24 = pneg %p18
    %p25 = scmp.eq.s32.totalorder %s9, 1
    %p26 = por %p24, %p25
    %p27 = scmp.ne.s32.totalorder %s19, %s22
    %p28 = scmp.eq.s32.totalorder %s9, 0
    %p29 = por %p27, %p28
    %p30 = scmp.ne.s32.totalorder %s19, %s22
    %p31 = scmp.eq.s32.totalorder %s14, 1
    %p32 = por %p30, %p31
    %p33 = scmp.ne.s32.totalorder %s22, %s23
    %p34 = scmp.eq.s32.totalorder %s14, 0
    %p35 = por %p33, %p34
    %p36 = scmp.ne.s32.totalorder %s22, %s23
    %p37 = scmp.eq.s32.totalorder %s15, 1
    %p38 = por %p36, %p37
    %p40 = scmp.ne.s32.totalorder %s23, %s39
    %p41 = scmp.eq.s32.totalorder %s15, 0
    %p42 = por %p40, %p41
    %s44 = sadd.s32 %s43, 1
    %p47 = scmp.eq.s32.totalorder %s9, 1
    %p48 = scmp.ne.s32.totalorder %s43, %s45
    %p49 = scmp.eq.s32.totalorder %s9, 0
    %p50 = por %p48, %p49
    %p51 = scmp.ne.s32.totalorder %s43, %s45
    %p52 = scmp.eq.s32.totalorder %s14, 1
    %p53 = por %p51, %p52
    %p54 = scmp.ne.s32.totalorder %s45, %s46
    %p55 = scmp.eq.s32.totalorder %s14, 0
    %p56 = por %p54, %p55
    %p57 = scmp.ne.s32.totalorder %s45, %s46
    %p58 = scmp.eq.s32.totalorder %s15, 1
    %p59 = por %p57, %p58
    %p61 = scmp.ne.s32.totalorder %s46, %s60
    %p62 = scmp.eq.s32.totalorder %s15, 0
    %p63 = por %p61, %p62
    %s65 = sadd.s32 %s64, 1
    %p68 = scmp.eq.s32.totalorder %s9, 1
    %p69 = scmp.ne.s32.totalorder %s64, %s66
    %p70 = scmp.eq.s32.totalorder %s9, 0
    %p71 = por %p69, %p70
    %p72 = scmp.ne.s32.totalorder %s64, %s66
    %p73 = scmp.eq.s32.totalorder %s14, 1
    %p74 = por %p72, %p73
    %p75 = scmp.ne.s32.totalorder %s66, %s67
    %p76 = scmp.eq.s32.totalorder %s14, 0
    %p77 = por %p75, %p76
    %p78 = scmp.ne.s32.totalorder %s66, %s67
    %p79 = scmp.eq.s32.totalorder %s15, 1
    %p80 = por %p78, %p79
    %p82 = scmp.ne.s32.totalorder %s67, %s81
    %p83 = scmp.eq.s32.totalorder %s15, 0
    %p84 = por %p82, %p83
    %s85 = ssub.s32 %s9, %s16
    %p86 = scmp.eq.s32.totalorder %s85, 0
    %s88 = sadd.s32 %s87, 1
    %s89 = scalar_select %p86, %s87, %s88
    %p92 = pneg %p86
    %p93 = scmp.eq.s32.totalorder %s9, 1
    %p94 = por %p92, %p93
    %p95 = scmp.ne.s32.totalorder %s87, %s90
    %p96 = scmp.eq.s32.totalorder %s9, 0
    %p97 = por %p95, %p96
    %p98 = scmp.ne.s32.totalorder %s87, %s90
    %p99 = scmp.eq.s32.totalorder %s14, 1
    %p100 = por %p98, %p99
    %p101 = scmp.ne.s32.totalorder %s90, %s91
    %p102 = scmp.eq.s32.totalorder %s14, 0
    %p103 = por %p101, %p102
    %p104 = scmp.ne.s32.totalorder %s90, %s91
    %p105 = scmp.eq.s32.totalorder %s15, 1
    %p106 = por %p104, %p105
    %p108 = scmp.ne.s32.totalorder %s91, %s107
    %p109 = scmp.eq.s32.totalorder %s15, 0
    %p110 = por %p108, %p109
    %p111 = scmp.le.s32.totalorder 1, %s9
    %p112 = scmp.lt.s32.totalorder %s9, 3
    %p113 = pnand %p111, %p112
    %p114 = pneg %p113
    // Predicated region
    $region9: #{cnn_forward.3} parent=5 // pred_check
      _
    $region10: #{cnn_forward.3} parent=5 // pred_check_branch
      %116 = sbr.rel (%p113) target = $region12
    $region11: #{cnn_forward.3} parent=5 // pred_region
      %s117 = ssub.s32 %s9, 1
      // Predicated region
      $region13: #{cnn_forward.3} parent=11 // pred_check
        %p118 = pneg %p56
      $region14: #{cnn_forward.3} parent=11 // pred_check_branch
        %120 = sbr.rel (%p118) target = $region16
      $region15: #{cnn_forward.3} parent=11 // pred_region
        _
      $region16: #{cnn_forward.3} parent=11 // pred_fallthru
        _
      // Predicated region
      $region17: #{cnn_forward.3} parent=11 // pred_check
        %p121 = pneg %p77
      $region18: #{cnn_forward.3} parent=11 // pred_check_branch
        %123 = sbr.rel (%p121) target = $region20
      $region19: #{cnn_forward.3} parent=11 // pred_region
        _
      $region20: #{cnn_forward.3} parent=11 // pred_fallthru
        _
    $region12: #{cnn_forward.3} parent=5 // pred_fallthru
      _
    %p124 = scmp.lt.s32.totalorder %s9, 2
    // Predicated region
    $region21: #{cnn_forward.3} parent=5 // pred_check
      %p125 = pneg %p124
    $region22: #{cnn_forward.3} parent=5 // pred_check_branch
      %127 = sbr.rel (%p125) target = $region24
    $region23: #{cnn_forward.3} parent=5 // pred_region
      // Predicated region
      $region25: #{cnn_forward.3} parent=23 // pred_check
        %p128 = pneg %p29
      $region26: #{cnn_forward.3} parent=23 // pred_check_branch
        %130 = sbr.rel (%p128) target = $region28
      $region27: #{cnn_forward.3} parent=23 // pred_region
        %p131 = scmp.lt.s32.totalorder %s9, 1
        %s132 = scalar_select %p131, %s9, 1
        %s133 = smul.addr %s132, 72
        %s134 = smul.addr %s133, 4
        %s135 = scalar_lea.vmem %s0, %s134
      $region28: #{cnn_forward.3} parent=23 // pred_fallthru
        _
    $region24: #{cnn_forward.3} parent=5 // pred_fallthru
      _
    %p136 = scmp.le.s32.totalorder 1, %s9
    %p137 = scmp.lt.s32.totalorder %s9, 3
    %p138 = pnand %p136, %p137
    %p139 = pneg %p138
    // Predicated region
    $region29: #{cnn_forward.3} parent=5 // pred_check
      _
    $region30: #{cnn_forward.3} parent=5 // pred_check_branch
      %141 = sbr.rel (%p138) target = $region32
    $region31: #{cnn_forward.3} parent=5 // pred_region
      %s142 = ssub.s32 %s9, 1
      %p143 = scmp.lt.s32.totalorder %s14, 1
      %s144 = scalar_select %p143, %s14, 1
      %s145 = smul.addr %s144, 72
      %s146 = smul.addr %s145, 4
      %s147 = scalar_lea.vmem %s0, %s146
      %p148 = pneg %p35
      %p149 = pneg %p32
      %p150 = pneg %p56
      %p151 = pneg %p53
      %p152 = pneg %p77
      %p153 = pneg %p74
      %p154 = pneg %p103
      %p155 = pneg %p100
      %p156 = scmp.lt.s32.totalorder %s14, 1
      %s157 = scalar_select %p156, %s14, 1
      %s158 = smul.addr %s157, 15
      %s159 = smul.addr %s158, 4
      %s160 = scalar_lea.vmem %s3, %s159
      %p161 = scmp.lt.s32.totalorder %s14, 1
      %s162 = scalar_select %p161, %s14, 1
      %s163 = smul.addr %s162, 72
      %s164 = smul.addr %s163, 4
      %s165 = scalar_lea.vmem %s0, %s164
      %p166 = scmp.lt.s32.totalorder %s14, 1
      %s167 = scalar_select %p166, %s14, 1
      %s168 = smul.addr %s167, 15
      %s169 = smul.addr %s168, 4
      %s170 = scalar_lea.vmem %s3, %s169
      %v172 = vld [vmem:[%s165] sm:$0xf]
      %v173 = vld [vmem:[%s165 + $0x4] sm:$0xf]
      %v174 = vld [vmem:[%s165 + $0x8] sm:$0xf]
      %v175 = vld [vmem:[%s165 + $0xc] sm:$0xf]
      %v176 = vld [vmem:[%s165 + $0x10] sm:$0xf]
      %v177 = vld [vmem:[%s165 + $0x14] sm:$0xf]
      %v178 = vld [vmem:[%s165 + $0x18] sm:$0xf]
      %v179 = vld [vmem:[%s165 + $0x1c] sm:$0xf]
      %v180 = vld [vmem:[%s165 + $0x20] sm:$0xf]
      %v181 = vld [vmem:[%s165 + $0x24] sm:$0xf]
      %v182 = vld [vmem:[%s165 + $0x28] sm:$0xf]
      %v183 = vld [vmem:[%s165 + $0x2c] sm:$0xf]
      %v184 = vld [vmem:[%s165 + $0x30] sm:$0xf]
      %v185 = vld [vmem:[%s165 + $0x34] sm:$0xf]
      %v186 = vld [vmem:[%s165 + $0x38] sm:$0xf]
      %v187 = vld [vmem:[%s165 + $0x3c] sm:$0xf]
      %v188 = vld [vmem:[%s165 + $0x40] sm:$0xf]
      %v189 = vld [vmem:[%s165 + $0x44] sm:$0xf]
      %v190 = vld [vmem:[%s165 + $0x48] sm:$0xf]
      %v191 = vld [vmem:[%s165 + $0x4c] sm:$0xf]
      %v192 = vld [vmem:[%s165 + $0x50] sm:$0xf]
      %v193 = vld [vmem:[%s165 + $0x54] sm:$0xf]
      %v194 = vld [vmem:[%s165 + $0x58] sm:$0xf]
      %v195 = vld [vmem:[%s165 + $0x5c] sm:$0xf]
      %v196 = vld [vmem:[%s165 + $0x60] sm:$0xf]
      %v197 = vld [vmem:[%s165 + $0x64] sm:$0xf]
      %v198 = vld [vmem:[%s165 + $0x68] sm:$0xf]
      %v199 = vld [vmem:[%s165 + $0x6c] sm:$0xf]
      %v200 = vld [vmem:[%s165 + $0x70] sm:$0xf]
      %v201 = vld [vmem:[%s165 + $0x74] sm:$0xf]
      %v202 = vld [vmem:[%s165 + $0x78] sm:$0xf]
      %v203 = vld [vmem:[%s165 + $0x7c] sm:$0xf]
      %v204 = vld [vmem:[%s165 + $0x80] sm:$0xf]
      %v205 = vld [vmem:[%s165 + $0x84] sm:$0xf]
      %v206 = vld [vmem:[%s165 + $0x88] sm:$0xf]
      %v207 = vld [vmem:[%s165 + $0x8c] sm:$0xf]
      %v208 = vld [vmem:[%s165 + $0x90] sm:$0xf]
      %v209 = vld [vmem:[%s165 + $0x94] sm:$0xf]
      %v210 = vld [vmem:[%s165 + $0x98] sm:$0xf]
      %v211 = vld [vmem:[%s165 + $0x9c] sm:$0xf]
      %v212 = vld [vmem:[%s165 + $0xa0] sm:$0xf]
      %v213 = vld [vmem:[%s165 + $0xa4] sm:$0xf]
      %v214 = vld [vmem:[%s165 + $0xa8] sm:$0xf]
      %v215 = vld [vmem:[%s165 + $0xac] sm:$0xf]
      %v216 = vld [vmem:[%s165 + $0xb0] sm:$0xf]
      %v217 = vld [vmem:[%s165 + $0xb4] sm:$0xf]
      %v218 = vld [vmem:[%s165 + $0xb8] sm:$0xf]
      %v219 = vld [vmem:[%s165 + $0xbc] sm:$0xf]
      %v220 = vld [vmem:[%s165 + $0xc0] sm:$0xf]
      %v221 = vld [vmem:[%s165 + $0xc4] sm:$0xf]
      %v222 = vld [vmem:[%s165 + $0xc8] sm:$0xf]
      %v223 = vld [vmem:[%s165 + $0xcc] sm:$0xf]
      %v224 = vld [vmem:[%s165 + $0xd0] sm:$0xf]
      %v225 = vld [vmem:[%s165 + $0xd4] sm:$0xf]
      %v226 = vld [vmem:[%s165 + $0xd8] sm:$0xf]
      %v227 = vld [vmem:[%s165 + $0xdc] sm:$0xf]
      %v228 = vld [vmem:[%s165 + $0xe0] sm:$0xf]
      %v229 = vld [vmem:[%s165 + $0xe4] sm:$0xf]
      %v230 = vld [vmem:[%s165 + $0xe8] sm:$0xf]
      %v231 = vld [vmem:[%s165 + $0xec] sm:$0xf]
      %v232 = vld [vmem:[%s165 + $0xf0] sm:$0xf]
      %v233 = vld [vmem:[%s165 + $0xf4] sm:$0xf]
      %v234 = vld [vmem:[%s165 + $0xf8] sm:$0xf]
      %v235 = vld [vmem:[%s165 + $0xfc] sm:$0xf]
      %v236 = vld [vmem:[%s165 + $0x100] sm:$0xf]
      %v237 = vld [vmem:[%s165 + $0x104] sm:$0xf]
      %v238 = vld [vmem:[%s165 + $0x108] sm:$0xf]
      %v239 = vld [vmem:[%s165 + $0x10c] sm:$0xf]
      %v240 = vld [vmem:[%s165 + $0x110] sm:$0xf]
      %v241 = vld [vmem:[%s165 + $0x114] sm:$0xf]
      %v242 = vld [vmem:[%s165 + $0x118] sm:$0xf]
      %v243 = vld [vmem:[%s165 + $0x11c] sm:$0xf]
      %v244 = vld [vmem:[%s1] sm:$0xf]
      %v317 = vunpack.c.l.b16 %v172
      %v318 = vunpack.c.l.b16 %v173
      %v319 = vunpack.c.l.b16 %v174
      %v320 = vunpack.c.l.b16 %v175
      %v321 = vunpack.c.l.b16 %v176
      %v322 = vunpack.c.l.b16 %v177
      %v323 = vunpack.c.l.b16 %v178
      %v324 = vunpack.c.l.b16 %v179
      %v325 = vunpack.c.l.b16 %v180
      %v326 = vunpack.c.l.b16 %v181
      %v327 = vunpack.c.l.b16 %v182
      %v328 = vunpack.c.l.b16 %v183
      %v329 = vunpack.c.l.b16 %v184
      %v330 = vunpack.c.l.b16 %v185
      %v331 = vunpack.c.l.b16 %v186
      %v332 = vunpack.c.l.b16 %v187
      %v333 = vunpack.c.l.b16 %v188
      %v334 = vunpack.c.l.b16 %v189
      %v335 = vunpack.c.l.b16 %v190
      %v336 = vunpack.c.l.b16 %v191
      %v337 = vunpack.c.l.b16 %v192
      %v338 = vunpack.c.l.b16 %v193
      %v339 = vunpack.c.l.b16 %v194
      %v340 = vunpack.c.l.b16 %v195
      %v341 = vunpack.c.l.b16 %v196
      %v342 = vunpack.c.l.b16 %v197
      %v343 = vunpack.c.l.b16 %v198
      %v344 = vunpack.c.l.b16 %v199
      %v345 = vunpack.c.l.b16 %v200
      %v346 = vunpack.c.l.b16 %v201
      %v347 = vunpack.c.l.b16 %v202
      %v348 = vunpack.c.l.b16 %v203
      %v349 = vunpack.c.l.b16 %v204
      %v350 = vunpack.c.l.b16 %v205
      %v351 = vunpack.c.l.b16 %v206
      %v352 = vunpack.c.l.b16 %v207
      %v353 = vunpack.c.l.b16 %v208
      %v354 = vunpack.c.l.b16 %v209
      %v355 = vunpack.c.l.b16 %v210
      %v356 = vunpack.c.l.b16 %v211
      %v357 = vunpack.c.l.b16 %v212
      %v358 = vunpack.c.l.b16 %v213
      %v359 = vunpack.c.l.b16 %v214
      %v360 = vunpack.c.l.b16 %v215
      %v361 = vunpack.c.l.b16 %v216
      %v362 = vunpack.c.l.b16 %v217
      %v363 = vunpack.c.l.b16 %v218
      %v364 = vunpack.c.l.b16 %v219
      %v365 = vunpack.c.l.b16 %v220
      %v366 = vunpack.c.l.b16 %v221
      %v367 = vunpack.c.l.b16 %v222
      %v368 = vunpack.c.l.b16 %v223
      %v369 = vunpack.c.l.b16 %v224
      %v370 = vunpack.c.l.b16 %v225
      %v371 = vunpack.c.l.b16 %v226
      %v372 = vunpack.c.l.b16 %v227
      %v373 = vunpack.c.l.b16 %v228
      %v374 = vunpack.c.l.b16 %v229
      %v375 = vunpack.c.l.b16 %v230
      %v376 = vunpack.c.l.b16 %v231
      %v377 = vunpack.c.l.b16 %v232
      %v378 = vunpack.c.l.b16 %v233
      %v379 = vunpack.c.l.b16 %v234
      %v380 = vunpack.c.l.b16 %v235
      %v381 = vunpack.c.l.b16 %v236
      %v382 = vunpack.c.l.b16 %v237
      %v383 = vunpack.c.l.b16 %v238
      %v384 = vunpack.c.l.b16 %v239
      %v385 = vunpack.c.l.b16 %v240
      %v386 = vunpack.c.l.b16 %v241
      %v387 = vunpack.c.l.b16 %v242
      %v388 = vunpack.c.l.b16 %v243
      %v389 = vpack.c.b16 %v318, %v317
      %v390 = vpack.c.b16 %v320, %v319
      %v391 = vpack.c.b16 %v322, %v321
      %v392 = vpack.c.b16 %v324, %v323
      %v393 = vpack.c.b16 %v326, %v325
      %v394 = vpack.c.b16 %v328, %v327
      %v395 = vpack.c.b16 %v330, %v329
      %v396 = vpack.c.b16 %v332, %v331
      %v397 = vpack.c.b16 %v334, %v333
      %v398 = vpack.c.b16 %v336, %v335
      %v399 = vpack.c.b16 %v338, %v337
      %v400 = vpack.c.b16 %v340, %v339
      %v401 = vpack.c.b16 %v342, %v341
      %v402 = vpack.c.b16 %v344, %v343
      %v403 = vpack.c.b16 %v346, %v345
      %v404 = vpack.c.b16 %v348, %v347
      %v405 = vpack.c.b16 %v350, %v349
      %v406 = vpack.c.b16 %v352, %v351
      %v407 = vpack.c.b16 %v354, %v353
      %v408 = vpack.c.b16 %v356, %v355
      %v409 = vpack.c.b16 %v358, %v357
      %v410 = vpack.c.b16 %v360, %v359
      %v411 = vpack.c.b16 %v362, %v361
      %v412 = vpack.c.b16 %v364, %v363
      %v413 = vpack.c.b16 %v366, %v365
      %v414 = vpack.c.b16 %v368, %v367
      %v415 = vpack.c.b16 %v370, %v369
      %v416 = vpack.c.b16 %v372, %v371
      %v417 = vpack.c.b16 %v374, %v373
      %v418 = vpack.c.b16 %v376, %v375
      %v419 = vpack.c.b16 %v378, %v377
      %v420 = vpack.c.b16 %v380, %v379
      %v421 = vpack.c.b16 %v382, %v381
      %v422 = vpack.c.b16 %v384, %v383
      %v423 = vpack.c.b16 %v386, %v385
      %v424 = vpack.c.b16 %v388, %v387
      %vm425 = vcmask 64512
      %v427 = vsel %vm425, %v389, 0
      %v430 = vsel %vm425, %v390, 0
      %v433 = vsel %vm425, %v391, 0
      %v436 = vsel %vm425, %v392, 0
      %v439 = vsel %vm425, %v393, 0
      %v442 = vsel %vm425, %v394, 0
      %v445 = vsel %vm425, %v395, 0
      %v448 = vsel %vm425, %v396, 0
      %v451 = vsel %vm425, %v397, 0
      %v454 = vsel %vm425, %v398, 0
      %v457 = vsel %vm425, %v399, 0
      %v460 = vsel %vm425, %v400, 0
      %v463 = vsel %vm425, %v401, 0
      %v466 = vsel %vm425, %v402, 0
      %v469 = vsel %vm425, %v403, 0
      %v472 = vsel %vm425, %v404, 0
      %v475 = vsel %vm425, %v405, 0
      %v478 = vsel %vm425, %v406, 0
      %v481 = vsel %vm425, %v407, 0
      %v484 = vsel %vm425, %v408, 0
      %v487 = vsel %vm425, %v409, 0
      %v490 = vsel %vm425, %v410, 0
      %v493 = vsel %vm425, %v411, 0
      %v496 = vsel %vm425, %v412, 0
      %v499 = vsel %vm425, %v413, 0
      %v502 = vsel %vm425, %v414, 0
      %v505 = vsel %vm425, %v415, 0
      %v508 = vsel %vm425, %v416, 0
      %v511 = vsel %vm425, %v417, 0
      %v514 = vsel %vm425, %v418, 0
      %v517 = vsel %vm425, %v419, 0
      %v520 = vsel %vm425, %v420, 0
      %v523 = vsel %vm425, %v421, 0
      %v526 = vsel %vm425, %v422, 0
      %v529 = vsel %vm425, %v423, 0
      %v532 = vsel %vm425, %v424, 0
      %vm534 = vcmask 1043456
      %v536 = vsel %vm534, %v244, 0
      %538 = vmatpush.bf16.msra.mxu0 0
      %539 = vmatpush.bf16.msra.mxu0 0
      %540 = vmatpush.bf16.msra.mxu0 0
      %541 = vmatpush.bf16.msra.mxu0 0
      %542 = vmatpush.bf16.msra.mxu0 0
      %543 = vmatpush.bf16.msra.mxu0 0
      %544 = vmatpush.bf16.msra.mxu0 0
      %545 = vmatpush.bf16.msra.mxu0 %v536
      %546 = vmatmul.bf16.gmra.mxu0 %v427
      %v547 = vpop.f32.mrf.mxu0
      %v548 = vadd.f32 0.0, %v547
      %v549 = vpop.f32.mrf.mxu0
      %v550 = vadd.f32 0.0, %v549
      %551 = vmatmul.bf16.gmra.mxu0 %v430
      %v552 = vpop.f32.mrf.mxu0
      %v553 = vadd.f32 0.0, %v552
      %v554 = vpop.f32.mrf.mxu0
      %v555 = vadd.f32 0.0, %v554
      %556 = vmatmul.bf16.gmra.mxu0 %v433
      %v557 = vpop.f32.mrf.mxu0
      %v558 = vadd.f32 0.0, %v557
      %v559 = vpop.f32.mrf.mxu0
      %v560 = vadd.f32 0.0, %v559
      %561 = vmatmul.bf16.gmra.mxu0 %v436
      %v562 = vpop.f32.mrf.mxu0
      %v563 = vadd.f32 0.0, %v562
      %v564 = vpop.f32.mrf.mxu0
      %v565 = vadd.f32 0.0, %v564
      %566 = vmatmul.bf16.gmra.mxu0 %v439
      %v567 = vpop.f32.mrf.mxu0
      %v568 = vadd.f32 0.0, %v567
      %v569 = vpop.f32.mrf.mxu0
      %v570 = vadd.f32 0.0, %v569
      %571 = vmatmul.bf16.gmra.mxu0 %v442
      %v572 = vpop.f32.mrf.mxu0
      %v573 = vadd.f32 0.0, %v572
      %v574 = vpop.f32.mrf.mxu0
      %v575 = vadd.f32 0.0, %v574
      %576 = vmatmul.bf16.gmra.mxu0 %v445
      %v577 = vpop.f32.mrf.mxu0
      %v578 = vadd.f32 0.0, %v577
      %v579 = vpop.f32.mrf.mxu0
      %v580 = vadd.f32 0.0, %v579
      %581 = vmatmul.bf16.gmra.mxu0 %v448
      %v582 = vpop.f32.mrf.mxu0
      %v583 = vadd.f32 0.0, %v582
      %v584 = vpop.f32.mrf.mxu0
      %v585 = vadd.f32 0.0, %v584
      %586 = vmatmul.bf16.gmra.mxu0 %v451
      %v587 = vpop.f32.mrf.mxu0
      %v588 = vadd.f32 0.0, %v587
      %v589 = vpop.f32.mrf.mxu0
      %v590 = vadd.f32 0.0, %v589
      %591 = vmatmul.bf16.gmra.mxu0 %v454
      %v592 = vpop.f32.mrf.mxu0
      %v593 = vadd.f32 0.0, %v592
      %v594 = vpop.f32.mrf.mxu0
      %v595 = vadd.f32 0.0, %v594
      %596 = vmatmul.bf16.gmra.mxu0 %v457
      %v597 = vpop.f32.mrf.mxu0
      %v598 = vadd.f32 0.0, %v597
      %v599 = vpop.f32.mrf.mxu0
      %v600 = vadd.f32 0.0, %v599
      %601 = vmatmul.bf16.gmra.mxu0 %v460
      %v602 = vpop.f32.mrf.mxu0
      %v603 = vadd.f32 0.0, %v602
      %v604 = vpop.f32.mrf.mxu0
      %v605 = vadd.f32 0.0, %v604
      %606 = vmatmul.bf16.gmra.mxu0 %v463
      %v607 = vpop.f32.mrf.mxu0
      %v608 = vadd.f32 0.0, %v607
      %v609 = vpop.f32.mrf.mxu0
      %v610 = vadd.f32 0.0, %v609
      %611 = vmatmul.bf16.gmra.mxu0 %v466
      %v612 = vpop.f32.mrf.mxu0
      %v613 = vadd.f32 0.0, %v612
      %v614 = vpop.f32.mrf.mxu0
      %v615 = vadd.f32 0.0, %v614
      %616 = vmatmul.bf16.gmra.mxu0 %v469
      %v617 = vpop.f32.mrf.mxu0
      %v618 = vadd.f32 0.0, %v617
      %v619 = vpop.f32.mrf.mxu0
      %v620 = vadd.f32 0.0, %v619
      %621 = vmatmul.bf16.gmra.mxu0 %v472
      %v622 = vpop.f32.mrf.mxu0
      %v623 = vadd.f32 0.0, %v622
      %v624 = vpop.f32.mrf.mxu0
      %v625 = vadd.f32 0.0, %v624
      %626 = vmatmul.bf16.gmra.mxu0 %v475
      %v627 = vpop.f32.mrf.mxu0
      %v628 = vadd.f32 0.0, %v627
      %v629 = vpop.f32.mrf.mxu0
      %v630 = vadd.f32 0.0, %v629
      %631 = vmatmul.bf16.gmra.mxu0 %v478
      %v632 = vpop.f32.mrf.mxu0
      %v633 = vadd.f32 0.0, %v632
      %v634 = vpop.f32.mrf.mxu0
      %v635 = vadd.f32 0.0, %v634
      %636 = vmatmul.bf16.gmra.mxu0 %v481
      %v637 = vpop.f32.mrf.mxu0
      %v638 = vadd.f32 0.0, %v637
      %v639 = vpop.f32.mrf.mxu0
      %v640 = vadd.f32 0.0, %v639
      %641 = vmatmul.bf16.gmra.mxu0 %v484
      %v642 = vpop.f32.mrf.mxu0
      %v643 = vadd.f32 0.0, %v642
      %v644 = vpop.f32.mrf.mxu0
      %v645 = vadd.f32 0.0, %v644
      %646 = vmatmul.bf16.gmra.mxu0 %v487
      %v647 = vpop.f32.mrf.mxu0
      %v648 = vadd.f32 0.0, %v647
      %v649 = vpop.f32.mrf.mxu0
      %v650 = vadd.f32 0.0, %v649
      %651 = vmatmul.bf16.gmra.mxu0 %v490
      %v652 = vpop.f32.mrf.mxu0
      %v653 = vadd.f32 0.0, %v652
      %v654 = vpop.f32.mrf.mxu0
      %v655 = vadd.f32 0.0, %v654
      %656 = vmatmul.bf16.gmra.mxu0 %v493
      %v657 = vpop.f32.mrf.mxu0
      %v658 = vadd.f32 0.0, %v657
      %v659 = vpop.f32.mrf.mxu0
      %v660 = vadd.f32 0.0, %v659
      %661 = vmatmul.bf16.gmra.mxu0 %v496
      %v662 = vpop.f32.mrf.mxu0
      %v663 = vadd.f32 0.0, %v662
      %v664 = vpop.f32.mrf.mxu0
      %v665 = vadd.f32 0.0, %v664
      %666 = vmatmul.bf16.gmra.mxu0 %v499
      %v667 = vpop.f32.mrf.mxu0
      %v668 = vadd.f32 0.0, %v667
      %v669 = vpop.f32.mrf.mxu0
      %v670 = vadd.f32 0.0, %v669
      %671 = vmatmul.bf16.gmra.mxu0 %v502
      %v672 = vpop.f32.mrf.mxu0
      %v673 = vadd.f32 0.0, %v672
      %v674 = vpop.f32.mrf.mxu0
      %v675 = vadd.f32 0.0, %v674
      %676 = vmatmul.bf16.gmra.mxu0 %v505
      %v677 = vpop.f32.mrf.mxu0
      %v678 = vadd.f32 0.0, %v677
      %v679 = vpop.f32.mrf.mxu0
      %v680 = vadd.f32 0.0, %v679
      %681 = vmatmul.bf16.gmra.mxu0 %v508
      %v682 = vpop.f32.mrf.mxu0
      %v683 = vadd.f32 0.0, %v682
      %v684 = vpop.f32.mrf.mxu0
      %v685 = vadd.f32 0.0, %v684
      %686 = vmatmul.bf16.gmra.mxu0 %v511
      %v687 = vpop.f32.mrf.mxu0
      %v688 = vadd.f32 0.0, %v687
      %v689 = vpop.f32.mrf.mxu0
      %v690 = vadd.f32 0.0, %v689
      %691 = vmatmul.bf16.gmra.mxu0 %v514
      %v692 = vpop.f32.mrf.mxu0
      %v693 = vadd.f32 0.0, %v692
      %v694 = vpop.f32.mrf.mxu0
      %v695 = vadd.f32 0.0, %v694
      %696 = vmatmul.bf16.gmra.mxu0 %v517
      %v697 = vpop.f32.mrf.mxu0
      %v698 = vadd.f32 0.0, %v697
      %v699 = vpop.f32.mrf.mxu0
      %v700 = vadd.f32 0.0, %v699
      %701 = vmatmul.bf16.gmra.mxu0 %v520
      %v702 = vpop.f32.mrf.mxu0
      %v703 = vadd.f32 0.0, %v702
      %v704 = vpop.f32.mrf.mxu0
      %v705 = vadd.f32 0.0, %v704
      %706 = vmatmul.bf16.gmra.mxu0 %v523
      %v707 = vpop.f32.mrf.mxu0
      %v708 = vadd.f32 0.0, %v707
      %v709 = vpop.f32.mrf.mxu0
      %v710 = vadd.f32 0.0, %v709
      %711 = vmatmul.bf16.gmra.mxu0 %v526
      %v712 = vpop.f32.mrf.mxu0
      %v713 = vadd.f32 0.0, %v712
      %v714 = vpop.f32.mrf.mxu0
      %v715 = vadd.f32 0.0, %v714
      %716 = vmatmul.bf16.gmra.mxu0 %v529
      %v717 = vpop.f32.mrf.mxu0
      %v718 = vadd.f32 0.0, %v717
      %v719 = vpop.f32.mrf.mxu0
      %v720 = vadd.f32 0.0, %v719
      %721 = vmatmul.bf16.gmra.mxu0 %v532
      %v722 = vpop.f32.mrf.mxu0
      %v723 = vadd.f32 0.0, %v722
      %v724 = vpop.f32.mrf.mxu0
      %v725 = vadd.f32 0.0, %v724
      %726 = vdwg.mxu0
      %v727 = vmax.f32 %v548, %v608
      %v728 = vmax.f32 %v550, %v610
      %v729 = vmax.f32 %v553, %v613
      %v730 = vmax.f32 %v555, %v615
      %v731 = vmax.f32 %v558, %v618
      %v732 = vmax.f32 %v560, %v620
      %v733 = vmax.f32 %v563, %v623
      %v734 = vmax.f32 %v565, %v625
      %v735 = vmax.f32 %v568, %v628
      %v736 = vmax.f32 %v570, %v630
      %v737 = vmax.f32 %v573, %v633
      %v738 = vmax.f32 %v575, %v635
      %v739 = vmax.f32 %v578, %v638
      %v740 = vmax.f32 %v580, %v640
      %v741 = vmax.f32 %v583, %v643
      %v742 = vmax.f32 %v585, %v645
      %v743 = vmax.f32 %v588, %v648
      %v744 = vmax.f32 %v590, %v650
      %v745 = vmax.f32 %v593, %v653
      %v746 = vmax.f32 %v595, %v655
      %v747 = vmax.f32 %v598, %v658
      %v748 = vmax.f32 %v600, %v660
      %v749 = vmax.f32 %v603, %v663
      %v750 = vmax.f32 %v605, %v665
      %v751 = vmax.f32 %v727, %v668
      %v752 = vmax.f32 %v728, %v670
      %v753 = vmax.f32 %v729, %v673
      %v754 = vmax.f32 %v730, %v675
      %v755 = vmax.f32 %v731, %v678
      %v756 = vmax.f32 %v732, %v680
      %v757 = vmax.f32 %v733, %v683
      %v758 = vmax.f32 %v734, %v685
      %v759 = vmax.f32 %v735, %v688
      %v760 = vmax.f32 %v736, %v690
      %v761 = vmax.f32 %v737, %v693
      %v762 = vmax.f32 %v738, %v695
      %v763 = vmax.f32 %v739, %v698
      %v764 = vmax.f32 %v740, %v700
      %v765 = vmax.f32 %v741, %v703
      %v766 = vmax.f32 %v742, %v705
      %v767 = vmax.f32 %v743, %v708
      %v768 = vmax.f32 %v744, %v710
      %v769 = vmax.f32 %v745, %v713
      %v770 = vmax.f32 %v746, %v715
      %v771 = vmax.f32 %v747, %v718
      %v772 = vmax.f32 %v748, %v720
      %v773 = vmax.f32 %v749, %v723
      %v774 = vmax.f32 %v750, %v725
      %v775 = vmax.f32 %v751, %v754
      %v776 = vmax.f32 %v752, %v755
      %v777 = vmax.f32 %v753, %v756
      %v778 = vmax.f32 %v754, %v757
      %v779 = vmax.f32 %v755, %v758
      %v780 = vmax.f32 %v756, %v759
      %v781 = vmax.f32 %v757, %v760
      %v782 = vmax.f32 %v758, %v761
      %v783 = vmax.f32 %v759, %v762
      %v784 = vmax.f32 %v760, %v763
      %v785 = vmax.f32 %v761, %v764
      %v786 = vmax.f32 %v762, %v765
      %v787 = vmax.f32 %v763, %v766
      %v788 = vmax.f32 %v764, %v767
      %v789 = vmax.f32 %v765, %v768
      %v790 = vmax.f32 %v775, %v757
      %v791 = vmax.f32 %v776, %v758
      %v792 = vmax.f32 %v777, %v759
      %v793 = vmax.f32 %v778, %v760
      %v794 = vmax.f32 %v779, %v761
      %v795 = vmax.f32 %v780, %v762
      %v796 = vmax.f32 %v781, %v763
      %v797 = vmax.f32 %v782, %v764
      %v798 = vmax.f32 %v783, %v765
      %v799 = vmax.f32 %v784, %v766
      %v800 = vmax.f32 %v785, %v767
      %v801 = vmax.f32 %v786, %v768
      %v802 = vmax.f32 %v787, %v769
      %v803 = vmax.f32 %v788, %v770
      %v804 = vmax.f32 %v789, %v771
      %v805 = vmax.f32 %v790, %v760
      %v806 = vmax.f32 %v791, %v761
      %v807 = vmax.f32 %v792, %v762
      %v808 = vmax.f32 %v793, %v763
      %v809 = vmax.f32 %v794, %v764
      %v810 = vmax.f32 %v795, %v765
      %v811 = vmax.f32 %v796, %v766
      %v812 = vmax.f32 %v797, %v767
      %v813 = vmax.f32 %v798, %v768
      %v814 = vmax.f32 %v799, %v769
      %v815 = vmax.f32 %v800, %v770
      %v816 = vmax.f32 %v801, %v771
      %v817 = vmax.f32 %v802, %v772
      %v818 = vmax.f32 %v803, %v773
      %v819 = vmax.f32 %v804, %v774
      %v820 = vld [vmem:[%s2] sm:$0x1]
      %v822 = vperm.slane %v820, 0
      %v824 = vadd.f32 %v805, %v822
      %v825 = vadd.f32 %v806, %v822
      %v826 = vadd.f32 %v807, %v822
      %v827 = vadd.f32 %v808, %v822
      %v828 = vadd.f32 %v809, %v822
      %v829 = vadd.f32 %v810, %v822
      %v830 = vadd.f32 %v811, %v822
      %v831 = vadd.f32 %v812, %v822
      %v832 = vadd.f32 %v813, %v822
      %v833 = vadd.f32 %v814, %v822
      %v834 = vadd.f32 %v815, %v822
      %v835 = vadd.f32 %v816, %v822
      %v836 = vadd.f32 %v817, %v822
      %v837 = vadd.f32 %v818, %v822
      %v838 = vadd.f32 %v819, %v822
      %v839 = vmax.f32 %v824, 0.0
      %v840 = vmax.f32 %v825, 0.0
      %v841 = vmax.f32 %v826, 0.0
      %v842 = vmax.f32 %v827, 0.0
      %v843 = vmax.f32 %v828, 0.0
      %v844 = vmax.f32 %v829, 0.0
      %v845 = vmax.f32 %v830, 0.0
      %v846 = vmax.f32 %v831, 0.0
      %v847 = vmax.f32 %v832, 0.0
      %v848 = vmax.f32 %v833, 0.0
      %v849 = vmax.f32 %v834, 0.0
      %v850 = vmax.f32 %v835, 0.0
      %v851 = vmax.f32 %v836, 0.0
      %v852 = vmax.f32 %v837, 0.0
      %v853 = vmax.f32 %v838, 0.0
      %v854 = vpack.c.bf16 %v839, %v839
      %v855 = vpack.c.bf16 %v840, %v840
      %v856 = vpack.c.bf16 %v841, %v841
      %v857 = vpack.c.bf16 %v842, %v842
      %v858 = vpack.c.bf16 %v843, %v843
      %v859 = vpack.c.bf16 %v844, %v844
      %v860 = vpack.c.bf16 %v845, %v845
      %v861 = vpack.c.bf16 %v846, %v846
      %v862 = vpack.c.bf16 %v847, %v847
      %v863 = vpack.c.bf16 %v848, %v848
      %v864 = vpack.c.bf16 %v849, %v849
      %v865 = vpack.c.bf16 %v850, %v850
      %v866 = vpack.c.bf16 %v851, %v851
      %v867 = vpack.c.bf16 %v852, %v852
      %v868 = vpack.c.bf16 %v853, %v853
      %vm869 = vcmask 257024
      %870 = vst.msk [vmem:[%s170] sm:$0xf] %vm869, %v854
      %871 = vst.msk [vmem:[%s170 + $0x4] sm:$0xf] %vm869, %v855
      %872 = vst.msk [vmem:[%s170 + $0x8] sm:$0xf] %vm869, %v856
      %873 = vst.msk [vmem:[%s170 + $0xc] sm:$0xf] %vm869, %v857
      %874 = vst.msk [vmem:[%s170 + $0x10] sm:$0xf] %vm869, %v858
      %875 = vst.msk [vmem:[%s170 + $0x14] sm:$0xf] %vm869, %v859
      %876 = vst.msk [vmem:[%s170 + $0x18] sm:$0xf] %vm869, %v860
      %877 = vst.msk [vmem:[%s170 + $0x1c] sm:$0xf] %vm869, %v861
      %878 = vst.msk [vmem:[%s170 + $0x20] sm:$0xf] %vm869, %v862
      %879 = vst.msk [vmem:[%s170 + $0x24] sm:$0xf] %vm869, %v863
      %880 = vst.msk [vmem:[%s170 + $0x28] sm:$0xf] %vm869, %v864
      %881 = vst.msk [vmem:[%s170 + $0x2c] sm:$0xf] %vm869, %v865
      %882 = vst.msk [vmem:[%s170 + $0x30] sm:$0xf] %vm869, %v866
      %883 = vst.msk [vmem:[%s170 + $0x34] sm:$0xf] %vm869, %v867
      %884 = vst.msk [vmem:[%s170 + $0x38] sm:$0xf] %vm869, %v868
      %p885 = scmp.lt.s32.totalorder %s14, 1
      %s886 = scalar_select %p885, %s14, 1
      %s887 = smul.addr %s886, 15
      %s888 = smul.addr %s887, 4
      %s889 = scalar_lea.vmem %s3, %s888
      // Predicated region
      $region33: #{cnn_forward.3} parent=31 // pred_check
        %p890 = pneg %p100
      $region34: #{cnn_forward.3} parent=31 // pred_check_branch
        %892 = sbr.rel (%p890) target = $region36
      $region35: #{cnn_forward.3} parent=31 // pred_region
        _
      $region36: #{cnn_forward.3} parent=31 // pred_fallthru
        _
    $region32: #{cnn_forward.3} parent=5 // pred_fallthru
      _
    %p893 = scmp.le.s32.totalorder 2, %s9
    // Predicated region
    $region37: #{cnn_forward.3} parent=5 // pred_check
      %p894 = pneg %p893
    $region38: #{cnn_forward.3} parent=5 // pred_check_branch
      %896 = sbr.rel (%p894) target = $region40
    $region39: #{cnn_forward.3} parent=5 // pred_region
      %s897 = ssub.s32 %s9, 2
      // Predicated region
      $region41: #{cnn_forward.3} parent=39 // pred_check
        %p898 = pneg %p106
      $region42: #{cnn_forward.3} parent=39 // pred_check_branch
        %900 = sbr.rel (%p898) target = $region44
      $region43: #{cnn_forward.3} parent=39 // pred_region
        %p901 = scmp.lt.s32.totalorder %s15, 1
        %s902 = scalar_select %p901, %s15, 1
        %s903 = smul.addr %s902, 15
        %s904 = smul.addr %s903, 4
        %s905 = scalar_lea.vmem %s3, %s904
      $region44: #{cnn_forward.3} parent=39 // pred_fallthru
        _
    $region40: #{cnn_forward.3} parent=5 // pred_fallthru
      _
  $region6: #{cnn_forward.3} parent=0 // loop_footer
    %s13 = sadd.s32 1, %s9
  $region7: #{cnn_forward.3} parent=0 // loop_footer_branch
    %8 = sbr.rel target = $region3
  $region8: #{cnn_forward.3} parent=0 // loop_exit
    _

// kernel: cnn_forward.4
$region0: #{cnn_forward.4}
  #allocation0 [shape = 'u32[]', space=smem, size = 0x4, offset = 0x4, fixed_abs, tag = 'smem constant byte address 0x4 - core index']
  #allocation1 [shape = 'u32[72,128]{1,0:T(1,128)}', space=vmem, size = 0x9000, scoped, tag = 'internal scratch']
  %s0 = inlined_call_operand.vmem [shape: bf16[2,5,3,8,32], index: 0, kind: input, shape index: {}]
  %s1 = inlined_call_operand.vmem [shape: bf16[7,32,32], index: 1, kind: input, shape index: {}]
  %s2 = inlined_call_operand.vmem [shape: f32[1,32], index: 2, kind: input, shape index: {}]
  %s3 = inlined_call_operand.vmem [shape: bf16[2,5,2,32], index: 3, kind: output, shape index: {}]
  %s4 = sld [smem:[#allocation0]]
  $region45: #{cnn_forward.4} parent=0
    _
  %s6 = ssub.s32 1, %s4
  %s7 = scalar_select 0, %s6, %s4
  loop: start=0, step=1, limit=12
  $region2: #{cnn_forward.4} parent=0 // loop_pre_header
    _
  $region3: #{cnn_forward.4} parent=0 // loop_header
    %s9 = sphi 0, %s13
    %p10 = scmp.ge.s32.totalorder %s9, 12
    %s16 = sphi 0, %s28
    %s17 = sphi 0, %s24
    %s18 = sphi 0, %s16
    %s19 = sphi 0, %s17
    %s20 = sphi 0, %s18
    %s21 = sphi 0, %s19
    %s33 = sphi 0, %s35
    %s36 = sphi 0, %s33
    %s37 = sphi 0, %s36
    %s53 = sphi 0, %s37
    %s57 = sphi 0, %s57
    %s59 = sphi 0, %s57
    %s60 = sphi 0, %s59
    %s74 = sphi 0, %s60
    %s78 = sphi 0, %s78
    %s80 = sphi 0, %s78
    %s81 = sphi 0, %s80
    %s95 = sphi 0, %s81
    %s103 = sphi 0, %s105
    %s106 = sphi 0, %s103
    %s107 = sphi 0, %s106
    %s123 = sphi 0, %s107
  $region4: #{cnn_forward.4} parent=0 // loop_header_branch
    %12 = sbr.rel (%p10) target = $region8
  $region5: #{cnn_forward.4} parent=0 // loop_body
    %s14 = ssub.s32 %s9, 1
    %s15 = ssub.s32 %s9, 2
    %s22 = sadd.s32 1, %s17
    %p23 = scmp.ge.s32.totalorder %s22, 5
    %s24 = scalar_select %p23, 0, %s22
    %s25 = sadd.s32 1, %s16
    %s26 = scalar_select %p23, %s25, %s16
    %p27 = scmp.ge.s32.totalorder %s26, 2
    %s28 = scalar_select %p27, 0, %s26
    %s29 = ssub.s32 %s16, %s28
    %s30 = ssub.s32 %s17, %s24
    %s31 = sor.u32 %s29, %s30
    %p32 = scmp.eq.s32.totalorder %s31, 0
    %s34 = sadd.s32 %s33, 1
    %s35 = scalar_select %p32, %s33, %s34
    %p38 = pneg %p32
    %p39 = scmp.eq.s32.totalorder %s9, 9
    %p40 = por %p38, %p39
    %p41 = scmp.ne.s32.totalorder %s33, %s36
    %p42 = scmp.eq.s32.totalorder %s9, 0
    %p43 = por %p41, %p42
    %p44 = scmp.ne.s32.totalorder %s33, %s36
    %p45 = scmp.eq.s32.totalorder %s14, 9
    %p46 = por %p44, %p45
    %p47 = scmp.ne.s32.totalorder %s36, %s37
    %p48 = scmp.eq.s32.totalorder %s14, 0
    %p49 = por %p47, %p48
    %p50 = scmp.ne.s32.totalorder %s36, %s37
    %p51 = scmp.eq.s32.totalorder %s15, 9
    %p52 = por %p50, %p51
    %p54 = scmp.ne.s32.totalorder %s37, %s53
    %p55 = scmp.eq.s32.totalorder %s15, 0
    %p56 = por %p54, %p55
    %s58 = sadd.s32 %s57, 1
    %p61 = scmp.eq.s32.totalorder %s9, 9
    %p62 = scmp.ne.s32.totalorder %s57, %s59
    %p63 = scmp.eq.s32.totalorder %s9, 0
    %p64 = por %p62, %p63
    %p65 = scmp.ne.s32.totalorder %s57, %s59
    %p66 = scmp.eq.s32.totalorder %s14, 9
    %p67 = por %p65, %p66
    %p68 = scmp.ne.s32.totalorder %s59, %s60
    %p69 = scmp.eq.s32.totalorder %s14, 0
    %p70 = por %p68, %p69
    %p71 = scmp.ne.s32.totalorder %s59, %s60
    %p72 = scmp.eq.s32.totalorder %s15, 9
    %p73 = por %p71, %p72
    %p75 = scmp.ne.s32.totalorder %s60, %s74
    %p76 = scmp.eq.s32.totalorder %s15, 0
    %p77 = por %p75, %p76
    %s79 = sadd.s32 %s78, 1
    %p82 = scmp.eq.s32.totalorder %s9, 9
    %p83 = scmp.ne.s32.totalorder %s78, %s80
    %p84 = scmp.eq.s32.totalorder %s9, 0
    %p85 = por %p83, %p84
    %p86 = scmp.ne.s32.totalorder %s78, %s80
    %p87 = scmp.eq.s32.totalorder %s14, 9
    %p88 = por %p86, %p87
    %p89 = scmp.ne.s32.totalorder %s80, %s81
    %p90 = scmp.eq.s32.totalorder %s14, 0
    %p91 = por %p89, %p90
    %p92 = scmp.ne.s32.totalorder %s80, %s81
    %p93 = scmp.eq.s32.totalorder %s15, 9
    %p94 = por %p92, %p93
    %p96 = scmp.ne.s32.totalorder %s81, %s95
    %p97 = scmp.eq.s32.totalorder %s15, 0
    %p98 = por %p96, %p97
    %s99 = ssub.s32 %s16, %s28
    %s100 = ssub.s32 %s17, %s24
    %s101 = sor.u32 %s99, %s100
    %p102 = scmp.eq.s32.totalorder %s101, 0
    %s104 = sadd.s32 %s103, 1
    %s105 = scalar_select %p102, %s103, %s104
    %p108 = pneg %p102
    %p109 = scmp.eq.s32.totalorder %s9, 9
    %p110 = por %p108, %p109
    %p111 = scmp.ne.s32.totalorder %s103, %s106
    %p112 = scmp.eq.s32.totalorder %s9, 0
    %p113 = por %p111, %p112
    %p114 = scmp.ne.s32.totalorder %s103, %s106
    %p115 = scmp.eq.s32.totalorder %s14, 9
    %p116 = por %p114, %p115
    %p117 = scmp.ne.s32.totalorder %s106, %s107
    %p118 = scmp.eq.s32.totalorder %s14, 0
    %p119 = por %p117, %p118
    %p120 = scmp.ne.s32.totalorder %s106, %s107
    %p121 = scmp.eq.s32.totalorder %s15, 9
    %p122 = por %p120, %p121
    %p124 = scmp.ne.s32.totalorder %s107, %s123
    %p125 = scmp.eq.s32.totalorder %s15, 0
    %p126 = por %p124, %p125
    %p127 = scmp.le.s32.totalorder 1, %s9
    %p128 = scmp.lt.s32.totalorder %s9, 11
    %p129 = pnand %p127, %p128
    %p130 = pneg %p129
    // Predicated region
    $region9: #{cnn_forward.4} parent=5 // pred_check
      _
    $region10: #{cnn_forward.4} parent=5 // pred_check_branch
      %132 = sbr.rel (%p129) target = $region12
    $region11: #{cnn_forward.4} parent=5 // pred_region
      %s133 = ssub.s32 %s9, 1
      // Predicated region
      $region13: #{cnn_forward.4} parent=11 // pred_check
        %p134 = pneg %p70
      $region14: #{cnn_forward.4} parent=11 // pred_check_branch
        %136 = sbr.rel (%p134) target = $region16
      $region15: #{cnn_forward.4} parent=11 // pred_region
        _
      $region16: #{cnn_forward.4} parent=11 // pred_fallthru
        _
      // Predicated region
      $region17: #{cnn_forward.4} parent=11 // pred_check
        %p137 = pneg %p91
      $region18: #{cnn_forward.4} parent=11 // pred_check_branch
        %139 = sbr.rel (%p137) target = $region20
      $region19: #{cnn_forward.4} parent=11 // pred_region
        _
      $region20: #{cnn_forward.4} parent=11 // pred_fallthru
        _
    $region12: #{cnn_forward.4} parent=5 // pred_fallthru
      _
    %p140 = scmp.lt.s32.totalorder %s9, 10
    // Predicated region
    $region21: #{cnn_forward.4} parent=5 // pred_check
      %p141 = pneg %p140
    $region22: #{cnn_forward.4} parent=5 // pred_check_branch
      %143 = sbr.rel (%p141) target = $region24
    $region23: #{cnn_forward.4} parent=5 // pred_region
      // Predicated region
      $region25: #{cnn_forward.4} parent=23 // pred_check
        %p144 = pneg %p43
      $region26: #{cnn_forward.4} parent=23 // pred_check_branch
        %146 = sbr.rel (%p144) target = $region28
      $region27: #{cnn_forward.4} parent=23 // pred_region
        %p147 = scmp.lt.s32.totalorder %s16, 1
        %s148 = scalar_select %p147, %s16, 1
        %p149 = scmp.lt.s32.totalorder %s17, 4
        %s150 = scalar_select %p149, %s17, 4
        %s151 = smul.addr %s150, 3
        %s152 = smul.addr %s148, 15
        %s153 = sadd.s32 %s151, %s152
        %s154 = smul.addr %s153, 4
        %s155 = scalar_lea.vmem %s0, %s154
      $region28: #{cnn_forward.4} parent=23 // pred_fallthru
        _
    $region24: #{cnn_forward.4} parent=5 // pred_fallthru
      _
    %p156 = scmp.le.s32.totalorder 1, %s9
    %p157 = scmp.lt.s32.totalorder %s9, 11
    %p158 = pnand %p156, %p157
    %p159 = pneg %p158
    // Predicated region
    $region29: #{cnn_forward.4} parent=5 // pred_check
      _
    $region30: #{cnn_forward.4} parent=5 // pred_check_branch
      %161 = sbr.rel (%p158) target = $region32
    $region31: #{cnn_forward.4} parent=5 // pred_region
      %s162 = ssub.s32 %s9, 1
      %p163 = scmp.lt.s32.totalorder %s18, 1
      %s164 = scalar_select %p163, %s18, 1
      %p165 = scmp.lt.s32.totalorder %s19, 4
      %s166 = scalar_select %p165, %s19, 4
      %s167 = smul.addr %s166, 3
      %s168 = smul.addr %s164, 15
      %s169 = sadd.s32 %s167, %s168
      %s170 = smul.addr %s169, 4
      %s171 = scalar_lea.vmem %s0, %s170
      %p172 = pneg %p49
      %p173 = pneg %p46
      %p174 = pneg %p70
      %p175 = pneg %p67
      %p176 = pneg %p91
      %p177 = pneg %p88
      %p178 = pneg %p119
      %p179 = pneg %p116
      %p180 = scmp.lt.s32.totalorder %s18, 1
      %s181 = scalar_select %p180, %s18, 1
      %p182 = scmp.lt.s32.totalorder %s19, 4
      %s183 = scalar_select %p182, %s19, 4
      %s184 = smul.addr %s181, 5
      %s185 = sadd.s32 %s183, %s184
      %s186 = scalar_lea.vmem %s3, %s185
      %p187 = scmp.lt.s32.totalorder %s18, 1
      %s188 = scalar_select %p187, %s18, 1
      %p189 = scmp.lt.s32.totalorder %s19, 4
      %s190 = scalar_select %p189, %s19, 4
      %s191 = smul.addr %s190, 3
      %s192 = smul.addr %s188, 15
      %s193 = sadd.s32 %s191, %s192
      %s194 = smul.addr %s193, 4
      %s195 = scalar_lea.vmem %s0, %s194
      %p196 = scmp.lt.s32.totalorder %s18, 1
      %s197 = scalar_select %p196, %s18, 1
      %p198 = scmp.lt.s32.totalorder %s19, 4
      %s199 = scalar_select %p198, %s19, 4
      %s200 = smul.addr %s197, 5
      %s201 = sadd.s32 %s199, %s200
      %s202 = scalar_lea.vmem %s3, %s201
      %v204 = vld [vmem:[%s1] sm:$0xf]
      %v205 = vld [vmem:[%s1 + $0x4] sm:$0xf]
      %v206 = vld [vmem:[%s1 + $0x8] sm:$0xf]
      %v207 = vld [vmem:[%s1 + $0xc] sm:$0xf]
      %s208 = scalar_lea.vmem %s1, 16
      %v209 = vld [vmem:[%s208] sm:$0xf]
      %v210 = vld [vmem:[%s208 + $0x4] sm:$0xf]
      %v211 = vld [vmem:[%s208 + $0x8] sm:$0xf]
      %v212 = vld [vmem:[%s208 + $0xc] sm:$0xf]
      %s213 = scalar_lea.vmem %s1, 32
      %v214 = vld [vmem:[%s213] sm:$0xf]
      %v215 = vld [vmem:[%s213 + $0x4] sm:$0xf]
      %v216 = vld [vmem:[%s213 + $0x8] sm:$0xf]
      %v217 = vld [vmem:[%s213 + $0xc] sm:$0xf]
      %s218 = scalar_lea.vmem %s1, 48
      %v219 = vld [vmem:[%s218] sm:$0xf]
      %v220 = vld [vmem:[%s218 + $0x4] sm:$0xf]
      %v221 = vld [vmem:[%s218 + $0x8] sm:$0xf]
      %v222 = vld [vmem:[%s218 + $0xc] sm:$0xf]
      %s223 = scalar_lea.vmem %s1, 64
      %v224 = vld [vmem:[%s223] sm:$0xf]
      %v225 = vld [vmem:[%s223 + $0x4] sm:$0xf]
      %v226 = vld [vmem:[%s223 + $0x8] sm:$0xf]
      %v227 = vld [vmem:[%s223 + $0xc] sm:$0xf]
      %s228 = scalar_lea.vmem %s1, 80
      %v229 = vld [vmem:[%s228] sm:$0xf]
      %v230 = vld [vmem:[%s228 + $0x4] sm:$0xf]
      %v231 = vld [vmem:[%s228 + $0x8] sm:$0xf]
      %v232 = vld [vmem:[%s228 + $0xc] sm:$0xf]
      %s233 = scalar_lea.vmem %s1, 96
      %v234 = vld [vmem:[%s233] sm:$0xf]
      %v235 = vld [vmem:[%s233 + $0x4] sm:$0xf]
      %v236 = vld [vmem:[%s233 + $0x8] sm:$0xf]
      %v237 = vld [vmem:[%s233 + $0xc] sm:$0xf]
      %v238 = vld [vmem:[%s195] sm:$0x1]
      %s239 = scalar_lea.vmem %s195, 4
      %v240 = vld [vmem:[%s239] sm:$0x1]
      %v245 = vunpack.c.l.b16 %v209
      %v246 = vunpack.c.l.b16 %v210
      %v247 = vunpack.c.l.b16 %v211
      %v248 = vunpack.c.l.b16 %v212
      %v249 = vpack.c.b16 %v246, %v245
      %v250 = vpack.c.b16 %v248, %v247
      %vm253 = vcmask 261120
      %v255 = vsel %vm253, %v240, 0
      %257 = vmatpush.bf16.msra.mxu0 0
      %258 = vmatpush.bf16.msra.mxu0 0
      %259 = vmatpush.bf16.msra.mxu0 0
      %260 = vmatpush.bf16.msra.mxu0 0
      %261 = vmatpush.bf16.msra.mxu0 0
      %262 = vmatpush.bf16.msra.mxu0 0
      %263 = vmatpush.bf16.msra.mxu0 %v250
      %264 = vmatpush.bf16.msra.mxu0 %v249
      %265 = vmatmul.bf16.gmra.mxu0 %v255
      %v266 = vpop.f32.mrf.mxu0
      %v267 = vadd.f32 0.0, %v266
      %v268 = vpop.f32.mrf.mxu0
      %269 = vdwg.mxu0
      %v274 = vunpack.c.l.b16 %v204
      %v275 = vunpack.c.l.b16 %v205
      %v276 = vunpack.c.l.b16 %v206
      %v277 = vunpack.c.l.b16 %v207
      %v278 = vpack.c.b16 %v275, %v274
      %v279 = vpack.c.b16 %v277, %v276
      %v283 = vsel %vm253, %v238, 0
      %285 = vmatpush.bf16.msra.mxu0 0
      %286 = vmatpush.bf16.msra.mxu0 0
      %287 = vmatpush.bf16.msra.mxu0 0
      %288 = vmatpush.bf16.msra.mxu0 0
      %289 = vmatpush.bf16.msra.mxu0 0
      %290 = vmatpush.bf16.msra.mxu0 0
      %291 = vmatpush.bf16.msra.mxu0 %v279
      %292 = vmatpush.bf16.msra.mxu0 %v278
      %293 = vmatmul.bf16.gmra.mxu0 %v283
      %v294 = vpop.f32.mrf.mxu0
      %v295 = vadd.f32 %v267, %v294
      %v296 = vpop.f32.mrf.mxu0
      %297 = vdwg.mxu0
      %s298 = scalar_lea.vmem %s195, 8
      %v299 = vld [vmem:[%s298] sm:$0x1]
      %v304 = vunpack.c.l.b16 %v214
      %v305 = vunpack.c.l.b16 %v215
      %v306 = vunpack.c.l.b16 %v216
      %v307 = vunpack.c.l.b16 %v217
      %v308 = vpack.c.b16 %v305, %v304
      %v309 = vpack.c.b16 %v307, %v306
      %v313 = vsel %vm253, %v299, 0
      %315 = vmatpush.bf16.msra.mxu0 0
      %316 = vmatpush.bf16.msra.mxu0 0
      %317 = vmatpush.bf16.msra.mxu0 0
      %318 = vmatpush.bf16.msra.mxu0 0
      %319 = vmatpush.bf16.msra.mxu0 0
      %320 = vmatpush.bf16.msra.mxu0 0
      %321 = vmatpush.bf16.msra.mxu0 %v309
      %322 = vmatpush.bf16.msra.mxu0 %v308
      %323 = vmatmul.bf16.gmra.mxu0 %v313
      %v324 = vpop.f32.mrf.mxu0
      %v325 = vadd.f32 0.0, %v324
      %v326 = vpop.f32.mrf.mxu0
      %327 = vdwg.mxu0
      %v328 = vadd.f32 %v295, %v325
      %v329 = vld [vmem:[%s195] sm:$0x3]
      %v331 = vunpack.c.l.b16 %v329
      %v332 = vpack.c.b16 %v331, %v331
      %v334 = vshrl.u32 %v332, 16
      %v336 = vshll.u32 %v332, 16
      %v338 = vrot.slane %v336, 1
      %v339 = vor.u32 %v334, %v338
      %v344 = vunpack.c.l.b16 %v219
      %v345 = vunpack.c.l.b16 %v220
      %v346 = vunpack.c.l.b16 %v221
      %v347 = vunpack.c.l.b16 %v222
      %v348 = vpack.c.b16 %v345, %v344
      %v349 = vpack.c.b16 %v347, %v346
      %v353 = vsel %vm253, %v339, 0
      %355 = vmatpush.bf16.msra.mxu0 0
      %356 = vmatpush.bf16.msra.mxu0 0
      %357 = vmatpush.bf16.msra.mxu0 0
      %358 = vmatpush.bf16.msra.mxu0 0
      %359 = vmatpush.bf16.msra.mxu0 0
      %360 = vmatpush.bf16.msra.mxu0 0
      %361 = vmatpush.bf16.msra.mxu0 %v349
      %362 = vmatpush.bf16.msra.mxu0 %v348
      %363 = vmatmul.bf16.gmra.mxu0 %v353
      %v364 = vpop.f32.mrf.mxu0
      %v365 = vadd.f32 0.0, %v364
      %v366 = vpop.f32.mrf.mxu0
      %367 = vdwg.mxu0
      %v368 = vadd.f32 %v328, %v365
      %v369 = vld [vmem:[%s239] sm:$0x3]
      %v371 = vunpack.c.l.b16 %v369
      %v372 = vpack.c.b16 %v371, %v371
      %v374 = vshrl.u32 %v372, 16
      %v376 = vshll.u32 %v372, 16
      %v378 = vrot.slane %v376, 1
      %v379 = vor.u32 %v374, %v378
      %v384 = vunpack.c.l.b16 %v224
      %v385 = vunpack.c.l.b16 %v225
      %v386 = vunpack.c.l.b16 %v226
      %v387 = vunpack.c.l.b16 %v227
      %v388 = vpack.c.b16 %v385, %v384
      %v389 = vpack.c.b16 %v387, %v386
      %v393 = vsel %vm253, %v379, 0
      %395 = vmatpush.bf16.msra.mxu0 0
      %396 = vmatpush.bf16.msra.mxu0 0
      %397 = vmatpush.bf16.msra.mxu0 0
      %398 = vmatpush.bf16.msra.mxu0 0
      %399 = vmatpush.bf16.msra.mxu0 0
      %400 = vmatpush.bf16.msra.mxu0 0
      %401 = vmatpush.bf16.msra.mxu0 %v389
      %402 = vmatpush.bf16.msra.mxu0 %v388
      %403 = vmatmul.bf16.gmra.mxu0 %v393
      %v404 = vpop.f32.mrf.mxu0
      %v405 = vadd.f32 0.0, %v404
      %v406 = vpop.f32.mrf.mxu0
      %407 = vdwg.mxu0
      %v408 = vadd.f32 %v368, %v405
      %v409 = vld [vmem:[%s298] sm:$0x3]
      %v411 = vunpack.c.l.b16 %v409
      %v412 = vpack.c.b16 %v411, %v411
      %v414 = vshrl.u32 %v412, 16
      %v416 = vshll.u32 %v412, 16
      %v418 = vrot.slane %v416, 1
      %v419 = vor.u32 %v414, %v418
      %v424 = vunpack.c.l.b16 %v229
      %v425 = vunpack.c.l.b16 %v230
      %v426 = vunpack.c.l.b16 %v231
      %v427 = vunpack.c.l.b16 %v232
      %v428 = vpack.c.b16 %v425, %v424
      %v429 = vpack.c.b16 %v427, %v426
      %v433 = vsel %vm253, %v419, 0
      %435 = vmatpush.bf16.msra.mxu0 0
      %436 = vmatpush.bf16.msra.mxu0 0
      %437 = vmatpush.bf16.msra.mxu0 0
      %438 = vmatpush.bf16.msra.mxu0 0
      %439 = vmatpush.bf16.msra.mxu0 0
      %440 = vmatpush.bf16.msra.mxu0 0
      %441 = vmatpush.bf16.msra.mxu0 %v429
      %442 = vmatpush.bf16.msra.mxu0 %v428
      %443 = vmatmul.bf16.gmra.mxu0 %v433
      %v444 = vpop.f32.mrf.mxu0
      %v445 = vadd.f32 0.0, %v444
      %v446 = vpop.f32.mrf.mxu0
      %447 = vdwg.mxu0
      %v448 = vadd.f32 %v408, %v445
      %v449 = vld [vmem:[%s195] sm:$0x2]
      %v451 = vunpack.c.l.b16 %v449
      %v452 = vpack.c.b16 %v451, %v451
      %v453 = vrot.slane %v452, 1
      %v458 = vunpack.c.l.b16 %v234
      %v459 = vunpack.c.l.b16 %v235
      %v460 = vunpack.c.l.b16 %v236
      %v461 = vunpack.c.l.b16 %v237
      %v462 = vpack.c.b16 %v459, %v458
      %v463 = vpack.c.b16 %v461, %v460
      %v467 = vsel %vm253, %v453, 0
      %469 = vmatpush.bf16.msra.mxu0 0
      %470 = vmatpush.bf16.msra.mxu0 0
      %471 = vmatpush.bf16.msra.mxu0 0
      %472 = vmatpush.bf16.msra.mxu0 0
      %473 = vmatpush.bf16.msra.mxu0 0
      %474 = vmatpush.bf16.msra.mxu0 0
      %475 = vmatpush.bf16.msra.mxu0 %v463
      %476 = vmatpush.bf16.msra.mxu0 %v462
      %477 = vmatmul.bf16.gmra.mxu0 %v467
      %v478 = vpop.f32.mrf.mxu0
      %v479 = vadd.f32 0.0, %v478
      %v480 = vpop.f32.mrf.mxu0
      %481 = vdwg.mxu0
      %v482 = vadd.f32 %v448, %v479
      %483 = vmatpush.bf16.msra.mxu0 0
      %484 = vmatpush.bf16.msra.mxu0 0
      %485 = vmatpush.bf16.msra.mxu0 0
      %486 = vmatpush.bf16.msra.mxu0 0
      %487 = vmatpush.bf16.msra.mxu0 0
      %488 = vmatpush.bf16.msra.mxu0 0
      %489 = vmatpush.bf16.msra.mxu0 %v250
      %490 = vmatpush.bf16.msra.mxu0 %v249
      %491 = vmatmul.bf16.gmra.mxu0 %v313
      %v492 = vpop.f32.mrf.mxu0
      %v493 = vadd.f32 0.0, %v492
      %v494 = vpop.f32.mrf.mxu0
      %495 = vdwg.mxu0
      %496 = vmatpush.bf16.msra.mxu0 0
      %497 = vmatpush.bf16.msra.mxu0 0
      %498 = vmatpush.bf16.msra.mxu0 0
      %499 = vmatpush.bf16.msra.mxu0 0
      %500 = vmatpush.bf16.msra.mxu0 0
      %501 = vmatpush.bf16.msra.mxu0 0
      %502 = vmatpush.bf16.msra.mxu0 %v279
      %503 = vmatpush.bf16.msra.mxu0 %v278
      %504 = vmatmul.bf16.gmra.mxu0 %v255
      %v505 = vpop.f32.mrf.mxu0
      %v506 = vadd.f32 %v493, %v505
      %v507 = vpop.f32.mrf.mxu0
      %508 = vdwg.mxu0
      %509 = vmatpush.bf16.msra.mxu0 0
      %510 = vmatpush.bf16.msra.mxu0 0
      %511 = vmatpush.bf16.msra.mxu0 0
      %512 = vmatpush.bf16.msra.mxu0 0
      %513 = vmatpush.bf16.msra.mxu0 0
      %514 = vmatpush.bf16.msra.mxu0 0
      %515 = vmatpush.bf16.msra.mxu0 %v309
      %516 = vmatpush.bf16.msra.mxu0 %v308
      %517 = vmatmul.bf16.gmra.mxu0 %v353
      %v518 = vpop.f32.mrf.mxu0
      %v519 = vadd.f32 0.0, %v518
      %v520 = vpop.f32.mrf.mxu0
      %521 = vdwg.mxu0
      %v522 = vadd.f32 %v506, %v519
      %523 = vmatpush.bf16.msra.mxu0 0
      %524 = vmatpush.bf16.msra.mxu0 0
      %525 = vmatpush.bf16.msra.mxu0 0
      %526 = vmatpush.bf16.msra.mxu0 0
      %527 = vmatpush.bf16.msra.mxu0 0
      %528 = vmatpush.bf16.msra.mxu0 0
      %529 = vmatpush.bf16.msra.mxu0 %v349
      %530 = vmatpush.bf16.msra.mxu0 %v348
      %531 = vmatmul.bf16.gmra.mxu0 %v393
      %v532 = vpop.f32.mrf.mxu0
      %v533 = vadd.f32 0.0, %v532
      %v534 = vpop.f32.mrf.mxu0
      %535 = vdwg.mxu0
      %v536 = vadd.f32 %v522, %v533
      %537 = vmatpush.bf16.msra.mxu0 0
      %538 = vmatpush.bf16.msra.mxu0 0
      %539 = vmatpush.bf16.msra.mxu0 0
      %540 = vmatpush.bf16.msra.mxu0 0
      %541 = vmatpush.bf16.msra.mxu0 0
      %542 = vmatpush.bf16.msra.mxu0 0
      %543 = vmatpush.bf16.msra.mxu0 %v389
      %544 = vmatpush.bf16.msra.mxu0 %v388
      %545 = vmatmul.bf16.gmra.mxu0 %v433
      %v546 = vpop.f32.mrf.mxu0
      %v547 = vadd.f32 0.0, %v546
      %v548 = vpop.f32.mrf.mxu0
      %549 = vdwg.mxu0
      %v550 = vadd.f32 %v536, %v547
      %551 = vmatpush.bf16.msra.mxu0 0
      %552 = vmatpush.bf16.msra.mxu0 0
      %553 = vmatpush.bf16.msra.mxu0 0
      %554 = vmatpush.bf16.msra.mxu0 0
      %555 = vmatpush.bf16.msra.mxu0 0
      %556 = vmatpush.bf16.msra.mxu0 0
      %557 = vmatpush.bf16.msra.mxu0 %v429
      %558 = vmatpush.bf16.msra.mxu0 %v428
      %559 = vmatmul.bf16.gmra.mxu0 %v467
      %v560 = vpop.f32.mrf.mxu0
      %v561 = vadd.f32 0.0, %v560
      %v562 = vpop.f32.mrf.mxu0
      %563 = vdwg.mxu0
      %v564 = vadd.f32 %v550, %v561
      %v565 = vld [vmem:[%s239] sm:$0x2]
      %v567 = vunpack.c.l.b16 %v565
      %v568 = vpack.c.b16 %v567, %v567
      %v569 = vrot.slane %v568, 1
      %v571 = vsel %vm253, %v569, 0
      %573 = vmatpush.bf16.msra.mxu0 0
      %574 = vmatpush.bf16.msra.mxu0 0
      %575 = vmatpush.bf16.msra.mxu0 0
      %576 = vmatpush.bf16.msra.mxu0 0
      %577 = vmatpush.bf16.msra.mxu0 0
      %578 = vmatpush.bf16.msra.mxu0 0
      %579 = vmatpush.bf16.msra.mxu0 %v463
      %580 = vmatpush.bf16.msra.mxu0 %v462
      %581 = vmatmul.bf16.gmra.mxu0 %v571
      %v582 = vpop.f32.mrf.mxu0
      %v583 = vadd.f32 0.0, %v582
      %v584 = vpop.f32.mrf.mxu0
      %585 = vdwg.mxu0
      %v586 = vadd.f32 %v564, %v583
      %v587 = vmax.f32 %v482, %v586
      %588 = vmatpush.bf16.msra.mxu0 0
      %589 = vmatpush.bf16.msra.mxu0 0
      %590 = vmatpush.bf16.msra.mxu0 0
      %591 = vmatpush.bf16.msra.mxu0 0
      %592 = vmatpush.bf16.msra.mxu0 0
      %593 = vmatpush.bf16.msra.mxu0 0
      %594 = vmatpush.bf16.msra.mxu0 %v250
      %595 = vmatpush.bf16.msra.mxu0 %v249
      %596 = vmatmul.bf16.gmra.mxu0 %v353
      %v597 = vpop.f32.mrf.mxu0
      %v598 = vadd.f32 0.0, %v597
      %v599 = vpop.f32.mrf.mxu0
      %600 = vdwg.mxu0
      %601 = vmatpush.bf16.msra.mxu0 0
      %602 = vmatpush.bf16.msra.mxu0 0
      %603 = vmatpush.bf16.msra.mxu0 0
      %604 = vmatpush.bf16.msra.mxu0 0
      %605 = vmatpush.bf16.msra.mxu0 0
      %606 = vmatpush.bf16.msra.mxu0 0
      %607 = vmatpush.bf16.msra.mxu0 %v279
      %608 = vmatpush.bf16.msra.mxu0 %v278
      %609 = vmatmul.bf16.gmra.mxu0 %v313
      %v610 = vpop.f32.mrf.mxu0
      %v611 = vadd.f32 %v598, %v610
      %v612 = vpop.f32.mrf.mxu0
      %613 = vdwg.mxu0
      %614 = vmatpush.bf16.msra.mxu0 0
      %615 = vmatpush.bf16.msra.mxu0 0
      %616 = vmatpush.bf16.msra.mxu0 0
      %617 = vmatpush.bf16.msra.mxu0 0
      %618 = vmatpush.bf16.msra.mxu0 0
      %619 = vmatpush.bf16.msra.mxu0 0
      %620 = vmatpush.bf16.msra.mxu0 %v309
      %621 = vmatpush.bf16.msra.mxu0 %v308
      %622 = vmatmul.bf16.gmra.mxu0 %v393
      %v623 = vpop.f32.mrf.mxu0
      %v624 = vadd.f32 0.0, %v623
      %v625 = vpop.f32.mrf.mxu0
      %626 = vdwg.mxu0
      %v627 = vadd.f32 %v611, %v624
      %628 = vmatpush.bf16.msra.mxu0 0
      %629 = vmatpush.bf16.msra.mxu0 0
      %630 = vmatpush.bf16.msra.mxu0 0
      %631 = vmatpush.bf16.msra.mxu0 0
      %632 = vmatpush.bf16.msra.mxu0 0
      %633 = vmatpush.bf16.msra.mxu0 0
      %634 = vmatpush.bf16.msra.mxu0 %v349
      %635 = vmatpush.bf16.msra.mxu0 %v348
      %636 = vmatmul.bf16.gmra.mxu0 %v433
      %v637 = vpop.f32.mrf.mxu0
      %v638 = vadd.f32 0.0, %v637
      %v639 = vpop.f32.mrf.mxu0
      %640 = vdwg.mxu0
      %v641 = vadd.f32 %v627, %v638
      %642 = vmatpush.bf16.msra.mxu0 0
      %643 = vmatpush.bf16.msra.mxu0 0
      %644 = vmatpush.bf16.msra.mxu0 0
      %645 = vmatpush.bf16.msra.mxu0 0
      %646 = vmatpush.bf16.msra.mxu0 0
      %647 = vmatpush.bf16.msra.mxu0 0
      %648 = vmatpush.bf16.msra.mxu0 %v389
      %649 = vmatpush.bf16.msra.mxu0 %v388
      %650 = vmatmul.bf16.gmra.mxu0 %v467
      %v651 = vpop.f32.mrf.mxu0
      %v652 = vadd.f32 0.0, %v651
      %v653 = vpop.f32.mrf.mxu0
      %654 = vdwg.mxu0
      %v655 = vadd.f32 %v641, %v652
      %656 = vmatpush.bf16.msra.mxu0 0
      %657 = vmatpush.bf16.msra.mxu0 0
      %658 = vmatpush.bf16.msra.mxu0 0
      %659 = vmatpush.bf16.msra.mxu0 0
      %660 = vmatpush.bf16.msra.mxu0 0
      %661 = vmatpush.bf16.msra.mxu0 0
      %662 = vmatpush.bf16.msra.mxu0 %v429
      %663 = vmatpush.bf16.msra.mxu0 %v428
      %664 = vmatmul.bf16.gmra.mxu0 %v571
      %v665 = vpop.f32.mrf.mxu0
      %v666 = vadd.f32 0.0, %v665
      %v667 = vpop.f32.mrf.mxu0
      %668 = vdwg.mxu0
      %v669 = vadd.f32 %v655, %v666
      %v670 = vld [vmem:[%s298] sm:$0x2]
      %v672 = vunpack.c.l.b16 %v670
      %v673 = vpack.c.b16 %v672, %v672
      %v674 = vrot.slane %v673, 1
      %v676 = vsel %vm253, %v674, 0
      %678 = vmatpush.bf16.msra.mxu0 0
      %679 = vmatpush.bf16.msra.mxu0 0
      %680 = vmatpush.bf16.msra.mxu0 0
      %681 = vmatpush.bf16.msra.mxu0 0
      %682 = vmatpush.bf16.msra.mxu0 0
      %683 = vmatpush.bf16.msra.mxu0 0
      %684 = vmatpush.bf16.msra.mxu0 %v463
      %685 = vmatpush.bf16.msra.mxu0 %v462
      %686 = vmatmul.bf16.gmra.mxu0 %v676
      %v687 = vpop.f32.mrf.mxu0
      %v688 = vadd.f32 0.0, %v687
      %v689 = vpop.f32.mrf.mxu0
      %690 = vdwg.mxu0
      %v691 = vadd.f32 %v669, %v688
      %v692 = vmax.f32 %v587, %v691
      %v693 = vld [vmem:[%s2] sm:$0x1]
      %v695 = vperm.slane %v693, 0
      %v697 = vadd.f32 %v692, %v695
      %v698 = vmax.f32 %v697, 0.0
      %v699 = vpack.c.bf16 %v698, %v698
      %vm700 = vcmask 253952
      %701 = vst.msk [vmem:[%s202] sm:$0x1] %vm700, %v699
      %p702 = scmp.lt.s32.totalorder %s18, 1
      %s703 = scalar_select %p702, %s18, 1
      %p704 = scmp.lt.s32.totalorder %s19, 4
      %s705 = scalar_select %p704, %s19, 4
      %s706 = smul.addr %s703, 5
      %s707 = sadd.s32 %s705, %s706
      %s708 = scalar_lea.vmem %s3, %s707
      // Predicated region
      $region33: #{cnn_forward.4} parent=31 // pred_check
        %p709 = pneg %p116
      $region34: #{cnn_forward.4} parent=31 // pred_check_branch
        %711 = sbr.rel (%p709) target = $region36
      $region35: #{cnn_forward.4} parent=31 // pred_region
        _
      $region36: #{cnn_forward.4} parent=31 // pred_fallthru
        _
    $region32: #{cnn_forward.4} parent=5 // pred_fallthru
      _
    %p712 = scmp.le.s32.totalorder 2, %s9
    // Predicated region
    $region37: #{cnn_forward.4} parent=5 // pred_check
      %p713 = pneg %p712
    $region38: #{cnn_forward.4} parent=5 // pred_check_branch
      %715 = sbr.rel (%p713) target = $region40
    $region39: #{cnn_forward.4} parent=5 // pred_region
      %s716 = ssub.s32 %s9, 2
      // Predicated region
      $region41: #{cnn_forward.4} parent=39 // pred_check
        %p717 = pneg %p122
      $region42: #{cnn_forward.4} parent=39 // pred_check_branch
        %719 = sbr.rel (%p717) target = $region44
      $region43: #{cnn_forward.4} parent=39 // pred_region
        %p720 = scmp.lt.s32.totalorder %s20, 1
        %s721 = scalar_select %p720, %s20, 1
        %p722 = scmp.lt.s32.totalorder %s21, 4
        %s723 = scalar_select %p722, %s21, 4
        %s724 = smul.addr %s721, 5
        %s725 = sadd.s32 %s723, %s724
        %s726 = scalar_lea.vmem %s3, %s725
      $region44: #{cnn_forward.4} parent=39 // pred_fallthru
        _
    $region40: #{cnn_forward.4} parent=5 // pred_fallthru
      _
  $region6: #{cnn_forward.4} parent=0 // loop_footer
    %s13 = sadd.s32 1, %s9
  $region7: #{cnn_forward.4} parent=0 // loop_footer_branch
    %8 = sbr.rel target = $region3
  $region8: #{cnn_forward.4} parent=0 // loop_exit
    _

// kernel: cnn_forward.5
$region0: #{cnn_forward.5}
  #allocation0 [shape = 'u32[]', space=smem, size = 0x4, offset = 0x4, fixed_abs, tag = 'smem constant byte address 0x4 - core index']
  #allocation1 [shape = 'u32[72,128]{1,0:T(1,128)}', space=vmem, size = 0x9000, scoped, tag = 'internal scratch']
  #allocation2 [shape = 'f32[8,128]{1,0:T(8,128)}', space=vmem, size = 0x1000, scoped, tag = 'scratch operand']
  #allocation3 [shape = 'f32[1,1]{1,0:T(1,128)S(1)}', space=vmem, size = 0x200, scoped, tag = 'scoped memory for cnn_forward.5']
  %s0 = inlined_call_operand.vmem [shape: bf16[8,384], index: 0, kind: input, shape index: {}]
  %s1 = inlined_call_operand.vmem [shape: bf16[384,128], index: 1, kind: input, shape index: {}]
  %s2 = inlined_call_operand.vmem [shape: f32[1,128], index: 2, kind: input, shape index: {}]
  %s3 = inlined_call_operand.vmem [shape: bf16[128,128], index: 3, kind: input, shape index: {}]
  %s4 = inlined_call_operand.vmem [shape: f32[1,128], index: 4, kind: input, shape index: {}]
  %s5 = inlined_call_operand.vmem [shape: f32[1,128], index: 5, kind: input, shape index: {}]
  %s6 = inlined_call_operand.<no memory space> [shape: f32[1,1], index: 6, kind: input, shape index: {}]
  %s7 = inlined_call_operand.vmem [shape: f32[8,1], index: 7, kind: output, shape index: {}]
  %s8 = sld [smem:[#allocation0]]
  $region69: #{cnn_forward.5} parent=0
    _
  %s10 = ssub.s32 1, %s8
  %s11 = scalar_select 0, %s10, %s8
  %v12 = vstv %s6
  %13 = vst [vmem:[#allocation3] sm:$0x1] %v12
  loop: start=0, step=1, limit=5
  $region2: #{cnn_forward.5} parent=0 // loop_pre_header
    _
  $region3: #{cnn_forward.5} parent=0 // loop_header
    %s15 = sphi 0, %s19
    %p16 = scmp.ge.s32.totalorder %s15, 5
    %s22 = sphi 0, %s34
    %s23 = sphi 0, %s30
    %s24 = sphi 0, %s22
    %s25 = sphi 0, %s23
    %s26 = sphi 0, %s24
    %s27 = sphi 0, %s25
    %s39 = sphi 0, %s41
    %s42 = sphi 0, %s39
    %s43 = sphi 0, %s42
    %s59 = sphi 0, %s43
    %s65 = sphi 0, %s67
    %s68 = sphi 0, %s65
    %s69 = sphi 0, %s68
    %s85 = sphi 0, %s69
    %s89 = sphi 0, %s89
    %s91 = sphi 0, %s89
    %s92 = sphi 0, %s91
    %s106 = sphi 0, %s92
    %s110 = sphi 0, %s110
    %s112 = sphi 0, %s110
    %s113 = sphi 0, %s112
    %s127 = sphi 0, %s113
    %s131 = sphi 0, %s131
    %s133 = sphi 0, %s131
    %s134 = sphi 0, %s133
    %s148 = sphi 0, %s134
    %s152 = sphi 0, %s152
    %s154 = sphi 0, %s152
    %s155 = sphi 0, %s154
    %s169 = sphi 0, %s155
    %s173 = sphi 0, %s173
    %s175 = sphi 0, %s173
    %s176 = sphi 0, %s175
    %s190 = sphi 0, %s176
    %s196 = sphi 0, %s198
    %s199 = sphi 0, %s196
    %s200 = sphi 0, %s199
    %s216 = sphi 0, %s200
  $region4: #{cnn_forward.5} parent=0 // loop_header_branch
    %18 = sbr.rel (%p16) target = $region8
  $region5: #{cnn_forward.5} parent=0 // loop_body
    %s20 = ssub.s32 %s15, 1
    %s21 = ssub.s32 %s15, 2
    %s28 = sadd.s32 1, %s23
    %p29 = scmp.ge.s32.totalorder %s28, 3
    %s30 = scalar_select %p29, 0, %s28
    %s31 = sadd.s32 1, %s22
    %s32 = scalar_select %p29, %s31, %s22
    %p33 = scmp.ge.s32.totalorder %s32, 1
    %s34 = scalar_select %p33, 0, %s32
    %s35 = ssub.s32 %s22, %s34
    %s36 = ssub.s32 %s23, %s30
    %s37 = sor.u32 %s35, %s36
    %p38 = scmp.eq.s32.totalorder %s37, 0
    %s40 = sadd.s32 %s39, 1
    %s41 = scalar_select %p38, %s39, %s40
    %p44 = pneg %p38
    %p45 = scmp.eq.s32.totalorder %s15, 2
    %p46 = por %p44, %p45
    %p47 = scmp.ne.s32.totalorder %s39, %s42
    %p48 = scmp.eq.s32.totalorder %s15, 0
    %p49 = por %p47, %p48
    %p50 = scmp.ne.s32.totalorder %s39, %s42
    %p51 = scmp.eq.s32.totalorder %s20, 2
    %p52 = por %p50, %p51
    %p53 = scmp.ne.s32.totalorder %s42, %s43
    %p54 = scmp.eq.s32.totalorder %s20, 0
    %p55 = por %p53, %p54
    %p56 = scmp.ne.s32.totalorder %s42, %s43
    %p57 = scmp.eq.s32.totalorder %s21, 2
    %p58 = por %p56, %p57
    %p60 = scmp.ne.s32.totalorder %s43, %s59
    %p61 = scmp.eq.s32.totalorder %s21, 0
    %p62 = por %p60, %p61
    %s63 = ssub.s32 %s23, %s30
    %p64 = scmp.eq.s32.totalorder %s63, 0
    %s66 = sadd.s32 %s65, 1
    %s67 = scalar_select %p64, %s65, %s66
    %p70 = pneg %p64
    %p71 = scmp.eq.s32.totalorder %s15, 2
    %p72 = por %p70, %p71
    %p73 = scmp.ne.s32.totalorder %s65, %s68
    %p74 = scmp.eq.s32.totalorder %s15, 0
    %p75 = por %p73, %p74
    %p76 = scmp.ne.s32.totalorder %s65, %s68
    %p77 = scmp.eq.s32.totalorder %s20, 2
    %p78 = por %p76, %p77
    %p79 = scmp.ne.s32.totalorder %s68, %s69
    %p80 = scmp.eq.s32.totalorder %s20, 0
    %p81 = por %p79, %p80
    %p82 = scmp.ne.s32.totalorder %s68, %s69
    %p83 = scmp.eq.s32.totalorder %s21, 2
    %p84 = por %p82, %p83
    %p86 = scmp.ne.s32.totalorder %s69, %s85
    %p87 = scmp.eq.s32.totalorder %s21, 0
    %p88 = por %p86, %p87
    %s90 = sadd.s32 %s89, 1
    %p93 = scmp.eq.s32.totalorder %s15, 2
    %p94 = scmp.ne.s32.totalorder %s89, %s91
    %p95 = scmp.eq.s32.totalorder %s15, 0
    %p96 = por %p94, %p95
    %p97 = scmp.ne.s32.totalorder %s89, %s91
    %p98 = scmp.eq.s32.totalorder %s20, 2
    %p99 = por %p97, %p98
    %p100 = scmp.ne.s32.totalorder %s91, %s92
    %p101 = scmp.eq.s32.totalorder %s20, 0
    %p102 = por %p100, %p101
    %p103 = scmp.ne.s32.totalorder %s91, %s92
    %p104 = scmp.eq.s32.totalorder %s21, 2
    %p105 = por %p103, %p104
    %p107 = scmp.ne.s32.totalorder %s92, %s106
    %p108 = scmp.eq.s32.totalorder %s21, 0
    %p109 = por %p107, %p108
    %s111 = sadd.s32 %s110, 1
    %p114 = scmp.eq.s32.totalorder %s15, 2
    %p115 = scmp.ne.s32.totalorder %s110, %s112
    %p116 = scmp.eq.s32.totalorder %s15, 0
    %p117 = por %p115, %p116
    %p118 = scmp.ne.s32.totalorder %s110, %s112
    %p119 = scmp.eq.s32.totalorder %s20, 2
    %p120 = por %p118, %p119
    %p121 = scmp.ne.s32.totalorder %s112, %s113
    %p122 = scmp.eq.s32.totalorder %s20, 0
    %p123 = por %p121, %p122
    %p124 = scmp.ne.s32.totalorder %s112, %s113
    %p125 = scmp.eq.s32.totalorder %s21, 2
    %p126 = por %p124, %p125
    %p128 = scmp.ne.s32.totalorder %s113, %s127
    %p129 = scmp.eq.s32.totalorder %s21, 0
    %p130 = por %p128, %p129
    %s132 = sadd.s32 %s131, 1
    %p135 = scmp.eq.s32.totalorder %s15, 2
    %p136 = scmp.ne.s32.totalorder %s131, %s133
    %p137 = scmp.eq.s32.totalorder %s15, 0
    %p138 = por %p136, %p137
    %p139 = scmp.ne.s32.totalorder %s131, %s133
    %p140 = scmp.eq.s32.totalorder %s20, 2
    %p141 = por %p139, %p140
    %p142 = scmp.ne.s32.totalorder %s133, %s134
    %p143 = scmp.eq.s32.totalorder %s20, 0
    %p144 = por %p142, %p143
    %p145 = scmp.ne.s32.totalorder %s133, %s134
    %p146 = scmp.eq.s32.totalorder %s21, 2
    %p147 = por %p145, %p146
    %p149 = scmp.ne.s32.totalorder %s134, %s148
    %p150 = scmp.eq.s32.totalorder %s21, 0
    %p151 = por %p149, %p150
    %s153 = sadd.s32 %s152, 1
    %p156 = scmp.eq.s32.totalorder %s15, 2
    %p157 = scmp.ne.s32.totalorder %s152, %s154
    %p158 = scmp.eq.s32.totalorder %s15, 0
    %p159 = por %p157, %p158
    %p160 = scmp.ne.s32.totalorder %s152, %s154
    %p161 = scmp.eq.s32.totalorder %s20, 2
    %p162 = por %p160, %p161
    %p163 = scmp.ne.s32.totalorder %s154, %s155
    %p164 = scmp.eq.s32.totalorder %s20, 0
    %p165 = por %p163, %p164
    %p166 = scmp.ne.s32.totalorder %s154, %s155
    %p167 = scmp.eq.s32.totalorder %s21, 2
    %p168 = por %p166, %p167
    %p170 = scmp.ne.s32.totalorder %s155, %s169
    %p171 = scmp.eq.s32.totalorder %s21, 0
    %p172 = por %p170, %p171
    %s174 = sadd.s32 %s173, 1
    %p177 = scmp.eq.s32.totalorder %s15, 2
    %p178 = scmp.ne.s32.totalorder %s173, %s175
    %p179 = scmp.eq.s32.totalorder %s15, 0
    %p180 = por %p178, %p179
    %p181 = scmp.ne.s32.totalorder %s173, %s175
    %p182 = scmp.eq.s32.totalorder %s20, 2
    %p183 = por %p181, %p182
    %p184 = scmp.ne.s32.totalorder %s175, %s176
    %p185 = scmp.eq.s32.totalorder %s20, 0
    %p186 = por %p184, %p185
    %p187 = scmp.ne.s32.totalorder %s175, %s176
    %p188 = scmp.eq.s32.totalorder %s21, 2
    %p189 = por %p187, %p188
    %p191 = scmp.ne.s32.totalorder %s176, %s190
    %p192 = scmp.eq.s32.totalorder %s21, 0
    %p193 = por %p191, %p192
    %s194 = ssub.s32 %s22, %s34
    %p195 = scmp.eq.s32.totalorder %s194, 0
    %s197 = sadd.s32 %s196, 1
    %s198 = scalar_select %p195, %s196, %s197
    %p201 = pneg %p195
    %p202 = scmp.eq.s32.totalorder %s15, 2
    %p203 = por %p201, %p202
    %p204 = scmp.ne.s32.totalorder %s196, %s199
    %p205 = scmp.eq.s32.totalorder %s15, 0
    %p206 = por %p204, %p205
    %p207 = scmp.ne.s32.totalorder %s196, %s199
    %p208 = scmp.eq.s32.totalorder %s20, 2
    %p209 = por %p207, %p208
    %p210 = scmp.ne.s32.totalorder %s199, %s200
    %p211 = scmp.eq.s32.totalorder %s20, 0
    %p212 = por %p210, %p211
    %p213 = scmp.ne.s32.totalorder %s199, %s200
    %p214 = scmp.eq.s32.totalorder %s21, 2
    %p215 = por %p213, %p214
    %p217 = scmp.ne.s32.totalorder %s200, %s216
    %p218 = scmp.eq.s32.totalorder %s21, 0
    %p219 = por %p217, %p218
    %p220 = scmp.le.s32.totalorder 1, %s15
    %p221 = scmp.lt.s32.totalorder %s15, 4
    %p222 = pnand %p220, %p221
    %p223 = pneg %p222
    // Predicated region
    $region9: #{cnn_forward.5} parent=5 // pred_check
      _
    $region10: #{cnn_forward.5} parent=5 // pred_check_branch
      %225 = sbr.rel (%p222) target = $region12
    $region11: #{cnn_forward.5} parent=5 // pred_region
      %s226 = ssub.s32 %s15, 1
      // Predicated region
      $region13: #{cnn_forward.5} parent=11 // pred_check
        %p227 = pneg %p102
      $region14: #{cnn_forward.5} parent=11 // pred_check_branch
        %229 = sbr.rel (%p227) target = $region16
      $region15: #{cnn_forward.5} parent=11 // pred_region
        _
      $region16: #{cnn_forward.5} parent=11 // pred_fallthru
        _
      // Predicated region
      $region17: #{cnn_forward.5} parent=11 // pred_check
        %p230 = pneg %p123
      $region18: #{cnn_forward.5} parent=11 // pred_check_branch
        %232 = sbr.rel (%p230) target = $region20
      $region19: #{cnn_forward.5} parent=11 // pred_region
        _
      $region20: #{cnn_forward.5} parent=11 // pred_fallthru
        _
      // Predicated region
      $region21: #{cnn_forward.5} parent=11 // pred_check
        %p233 = pneg %p144
      $region22: #{cnn_forward.5} parent=11 // pred_check_branch
        %235 = sbr.rel (%p233) target = $region24
      $region23: #{cnn_forward.5} parent=11 // pred_region
        _
      $region24: #{cnn_forward.5} parent=11 // pred_fallthru
        _
      // Predicated region
      $region25: #{cnn_forward.5} parent=11 // pred_check
        %p236 = pneg %p165
      $region26: #{cnn_forward.5} parent=11 // pred_check_branch
        %238 = sbr.rel (%p236) target = $region28
      $region27: #{cnn_forward.5} parent=11 // pred_region
        _
      $region28: #{cnn_forward.5} parent=11 // pred_fallthru
        _
      // Predicated region
      $region29: #{cnn_forward.5} parent=11 // pred_check
        %p239 = pneg %p186
      $region30: #{cnn_forward.5} parent=11 // pred_check_branch
        %241 = sbr.rel (%p239) target = $region32
      $region31: #{cnn_forward.5} parent=11 // pred_region
        _
      $region32: #{cnn_forward.5} parent=11 // pred_fallthru
        _
    $region12: #{cnn_forward.5} parent=5 // pred_fallthru
      _
    %p242 = scmp.lt.s32.totalorder %s15, 3
    // Predicated region
    $region33: #{cnn_forward.5} parent=5 // pred_check
      %p243 = pneg %p242
    $region34: #{cnn_forward.5} parent=5 // pred_check_branch
      %245 = sbr.rel (%p243) target = $region36
    $region35: #{cnn_forward.5} parent=5 // pred_region
      // Predicated region
      $region37: #{cnn_forward.5} parent=35 // pred_check
        %p246 = pneg %p49
      $region38: #{cnn_forward.5} parent=35 // pred_check_branch
        %248 = sbr.rel (%p246) target = $region40
      $region39: #{cnn_forward.5} parent=35 // pred_region
        %p249 = scmp.lt.s32.totalorder %s22, 0
        %s250 = scalar_select %p249, %s22, 0
        %p251 = scmp.lt.s32.totalorder %s23, 2
        %s252 = scalar_select %p251, %s23, 2
        %s253 = smul.addr %s250, 3
        %s254 = sadd.s32 %s252, %s253
        %s255 = smul.addr %s254, 4
        %s256 = scalar_lea.vmem %s0, %s255
      $region40: #{cnn_forward.5} parent=35 // pred_fallthru
        _
      // Predicated region
      $region41: #{cnn_forward.5} parent=35 // pred_check
        %p257 = pneg %p75
      $region42: #{cnn_forward.5} parent=35 // pred_check_branch
        %259 = sbr.rel (%p257) target = $region44
      $region43: #{cnn_forward.5} parent=35 // pred_region
        %s260 = smul.u32 16, %s23
        %p261 = scmp.lt.s32.totalorder %s260, 47
        %s262 = scalar_select %p261, %s260, 47
        %s263 = smul.addr %s262, 4
        %s264 = scalar_lea.vmem %s1, %s263
        %s265 = smul.u32 16, %s23
      $region44: #{cnn_forward.5} parent=35 // pred_fallthru
        _
    $region36: #{cnn_forward.5} parent=5 // pred_fallthru
      _
    %p266 = scmp.le.s32.totalorder 1, %s15
    %p267 = scmp.lt.s32.totalorder %s15, 4
    %p268 = pnand %p266, %p267
    %p269 = pneg %p268
    // Predicated region
    $region45: #{cnn_forward.5} parent=5 // pred_check
      _
    $region46: #{cnn_forward.5} parent=5 // pred_check_branch
      %271 = sbr.rel (%p268) target = $region48
    $region47: #{cnn_forward.5} parent=5 // pred_region
      %s272 = ssub.s32 %s15, 1
      %p273 = scmp.lt.s32.totalorder %s24, 0
      %s274 = scalar_select %p273, %s24, 0
      %p275 = scmp.lt.s32.totalorder %s25, 2
      %s276 = scalar_select %p275, %s25, 2
      %s277 = smul.addr %s274, 3
      %s278 = sadd.s32 %s276, %s277
      %s279 = smul.addr %s278, 4
      %s280 = scalar_lea.vmem %s0, %s279
      %p281 = pneg %p55
      %p282 = pneg %p52
      %s283 = smul.u32 16, %s25
      %p284 = scmp.lt.s32.totalorder %s283, 47
      %s285 = scalar_select %p284, %s283, 47
      %s286 = smul.addr %s285, 4
      %s287 = scalar_lea.vmem %s1, %s286
      %p288 = pneg %p81
      %p289 = pneg %p78
      %p290 = pneg %p102
      %p291 = pneg %p99
      %p292 = pneg %p123
      %p293 = pneg %p120
      %p294 = pneg %p144
      %p295 = pneg %p141
      %p296 = pneg %p165
      %p297 = pneg %p162
      %p298 = pneg %p186
      %p299 = pneg %p183
      %p300 = pneg %p212
      %p301 = pneg %p209
      %p302 = scmp.lt.s32.totalorder %s24, 0
      %s303 = scalar_select %p302, %s24, 0
      %s304 = smul.addr %s303, 8
      %s305 = scalar_lea.vmem %s7, %s304
      %p306 = scmp.lt.s32.totalorder %s24, 0
      %s307 = scalar_select %p306, %s24, 0
      %p308 = scmp.lt.s32.totalorder %s25, 2
      %s309 = scalar_select %p308, %s25, 2
      %s310 = smul.addr %s307, 3
      %s311 = sadd.s32 %s309, %s310
      %s312 = smul.addr %s311, 4
      %s313 = scalar_lea.vmem %s0, %s312
      %s314 = smul.u32 16, %s25
      %p315 = scmp.lt.s32.totalorder %s314, 47
      %s316 = scalar_select %p315, %s314, 47
      %s317 = smul.addr %s316, 4
      %s318 = scalar_lea.vmem %s1, %s317
      %s319 = smul.u32 16, %s25
      %p320 = scmp.lt.s32.totalorder %s24, 0
      %s321 = scalar_select %p320, %s24, 0
      %s322 = smul.addr %s321, 8
      %s323 = scalar_lea.vmem %s7, %s322
      %p324 = scmp.eq.s32.totalorder %s25, 0
      // Predicated region
      $region49: #{cnn_forward.5} parent=47 // pred_check
        %p325 = pneg %p324
      $region50: #{cnn_forward.5} parent=47 // pred_check_branch
        %327 = sbr.rel (%p325) target = $region52
      $region51: #{cnn_forward.5} parent=47 // pred_region
        %328 = vst [vmem:[#allocation2] sm:$0xff] 0.0
      $region52: #{cnn_forward.5} parent=47 // pred_fallthru
        _
      %v329 = vld [vmem:[#allocation2] sm:$0xff]
      %v330 = vld [vmem:[%s313] sm:$0xf]
      %v331 = vld [vmem:[%s318] sm:$0xf]
      %v332 = vld [vmem:[%s318 + $0x4] sm:$0xf]
      %v333 = vld [vmem:[%s318 + $0x8] sm:$0xf]
      %v334 = vld [vmem:[%s318 + $0xc] sm:$0xf]
      %v335 = vld [vmem:[%s318 + $0x10] sm:$0xf]
      %v336 = vld [vmem:[%s318 + $0x14] sm:$0xf]
      %v337 = vld [vmem:[%s318 + $0x18] sm:$0xf]
      %v338 = vld [vmem:[%s318 + $0x1c] sm:$0xf]
      %v339 = vld [vmem:[%s318 + $0x20] sm:$0xf]
      %v340 = vld [vmem:[%s318 + $0x24] sm:$0xf]
      %v341 = vld [vmem:[%s318 + $0x28] sm:$0xf]
      %v342 = vld [vmem:[%s318 + $0x2c] sm:$0xf]
      %v343 = vld [vmem:[%s318 + $0x30] sm:$0xf]
      %v344 = vld [vmem:[%s318 + $0x34] sm:$0xf]
      %v345 = vld [vmem:[%s318 + $0x38] sm:$0xf]
      %v346 = vld [vmem:[%s318 + $0x3c] sm:$0xf]
      %v363 = vunpack.c.l.b16 %v331
      %v364 = vunpack.c.l.b16 %v332
      %v365 = vunpack.c.l.b16 %v333
      %v366 = vunpack.c.l.b16 %v334
      %v367 = vunpack.c.l.b16 %v335
      %v368 = vunpack.c.l.b16 %v336
      %v369 = vunpack.c.l.b16 %v337
      %v370 = vunpack.c.l.b16 %v338
      %v371 = vunpack.c.l.b16 %v339
      %v372 = vunpack.c.l.b16 %v340
      %v373 = vunpack.c.l.b16 %v341
      %v374 = vunpack.c.l.b16 %v342
      %v375 = vunpack.c.l.b16 %v343
      %v376 = vunpack.c.l.b16 %v344
      %v377 = vunpack.c.l.b16 %v345
      %v378 = vunpack.c.l.b16 %v346
      %v379 = vpack.c.b16 %v364, %v363
      %v380 = vpack.c.b16 %v366, %v365
      %v381 = vpack.c.b16 %v368, %v367
      %v382 = vpack.c.b16 %v370, %v369
      %v383 = vpack.c.b16 %v372, %v371
      %v384 = vpack.c.b16 %v374, %v373
      %v385 = vpack.c.b16 %v376, %v375
      %v386 = vpack.c.b16 %v378, %v377
      %395 = vmatpush.bf16.msra.mxu0 %v386
      %396 = vmatpush.bf16.msra.mxu0 %v385
      %397 = vmatpush.bf16.msra.mxu0 %v384
      %398 = vmatpush.bf16.msra.mxu0 %v383
      %399 = vmatpush.bf16.msra.mxu0 %v382
      %400 = vmatpush.bf16.msra.mxu0 %v381
      %401 = vmatpush.bf16.msra.mxu0 %v380
      %402 = vmatpush.bf16.msra.mxu0 %v379
      %403 = vmatmul.bf16.gmra.mxu0 %v330
      %v404 = vpop.f32.mrf.mxu0
      %v405 = vadd.f32 0.0, %v404
      %v406 = vpop.f32.mrf.mxu0
      %407 = vdwg.mxu0
      %v408 = vadd.f32 %v329, %v405
      %409 = vst [vmem:[#allocation2] sm:$0xff] %v408
      %p410 = scmp.eq.s32.totalorder %s25, 2
      // Predicated region
      $region53: #{cnn_forward.5} parent=47 // pred_check
        %p411 = pneg %p410
      $region54: #{cnn_forward.5} parent=47 // pred_check_branch
        %413 = sbr.rel (%p411) target = $region56
      $region55: #{cnn_forward.5} parent=47 // pred_region
        %v414 = vld [vmem:[#allocation2] sm:$0xff]
        %v415 = vld [vmem:[%s2] sm:$0x1]
        %v417 = vperm.slane %v415, 0
        %v419 = vadd.f32 %v414, %v417
        %v420 = vmax.f32 %v419, 0.0
        %v421 = vpack.c.bf16 %v420, %v420
        %v422 = vld [vmem:[%s3] sm:$0xf]
        %v423 = vld [vmem:[%s3 + $0x4] sm:$0xf]
        %v424 = vld [vmem:[%s3 + $0x8] sm:$0xf]
        %v425 = vld [vmem:[%s3 + $0xc] sm:$0xf]
        %v426 = vld [vmem:[%s3 + $0x10] sm:$0xf]
        %v427 = vld [vmem:[%s3 + $0x14] sm:$0xf]
        %v428 = vld [vmem:[%s3 + $0x18] sm:$0xf]
        %v429 = vld [vmem:[%s3 + $0x1c] sm:$0xf]
        %v430 = vld [vmem:[%s3 + $0x20] sm:$0xf]
        %v431 = vld [vmem:[%s3 + $0x24] sm:$0xf]
        %v432 = vld [vmem:[%s3 + $0x28] sm:$0xf]
        %v433 = vld [vmem:[%s3 + $0x2c] sm:$0xf]
        %v434 = vld [vmem:[%s3 + $0x30] sm:$0xf]
        %v435 = vld [vmem:[%s3 + $0x34] sm:$0xf]
        %v436 = vld [vmem:[%s3 + $0x38] sm:$0xf]
        %v437 = vld [vmem:[%s3 + $0x3c] sm:$0xf]
        %v438 = vld [vmem:[%s4] sm:$0x1]
        %v440 = vperm.slane %v438, 0
        %v458 = vunpack.c.l.b16 %v422
        %v459 = vunpack.c.l.b16 %v423
        %v460 = vunpack.c.l.b16 %v424
        %v461 = vunpack.c.l.b16 %v425
        %v462 = vunpack.c.l.b16 %v426
        %v463 = vunpack.c.l.b16 %v427
        %v464 = vunpack.c.l.b16 %v428
        %v465 = vunpack.c.l.b16 %v429
        %v466 = vunpack.c.l.b16 %v430
        %v467 = vunpack.c.l.b16 %v431
        %v468 = vunpack.c.l.b16 %v432
        %v469 = vunpack.c.l.b16 %v433
        %v470 = vunpack.c.l.b16 %v434
        %v471 = vunpack.c.l.b16 %v435
        %v472 = vunpack.c.l.b16 %v436
        %v473 = vunpack.c.l.b16 %v437
        %v474 = vpack.c.b16 %v459, %v458
        %v475 = vpack.c.b16 %v461, %v460
        %v476 = vpack.c.b16 %v463, %v462
        %v477 = vpack.c.b16 %v465, %v464
        %v478 = vpack.c.b16 %v467, %v466
        %v479 = vpack.c.b16 %v469, %v468
        %v480 = vpack.c.b16 %v471, %v470
        %v481 = vpack.c.b16 %v473, %v472
        %490 = vmatpush.bf16.msra.mxu0 %v481
        %491 = vmatpush.bf16.msra.mxu0 %v480
        %492 = vmatpush.bf16.msra.mxu0 %v479
        %493 = vmatpush.bf16.msra.mxu0 %v478
        %494 = vmatpush.bf16.msra.mxu0 %v477
        %495 = vmatpush.bf16.msra.mxu0 %v476
        %496 = vmatpush.bf16.msra.mxu0 %v475
        %497 = vmatpush.bf16.msra.mxu0 %v474
        %498 = vmatmul.bf16.gmra.mxu0 %v421
        %v499 = vpop.f32.mrf.mxu0
        %v500 = vadd.f32 %v440, %v499
        %v501 = vpop.f32.mrf.mxu0
        %502 = vdwg.mxu0
        %v503 = vmax.f32 %v500, 0.0
        %v504 = vld [vmem:[%s5] sm:$0x1]
        %v506 = vperm.slane %v504, 0
        %v508 = vmul.f32 %v503, %v506
        %509 = vadd.xlane.f32.xlu0 %v508
        %v510 = vpop.xlane.xlu0 %509
        %v511 = vld [vmem:[#allocation3] sm:$0x1]
        %v513 = vperm.slane %v511, 0
        %v515 = vadd.f32 %v510, %v513
        %v516 = vmax.f32 %v515, 0.0
        %vm517 = vcmask 7168
        %518 = vst.msk [vmem:[%s323] sm:$0xff] %vm517, %v516
      $region56: #{cnn_forward.5} parent=47 // pred_fallthru
        _
      %p519 = scmp.lt.s32.totalorder %s24, 0
      %s520 = scalar_select %p519, %s24, 0
      %s521 = smul.addr %s520, 8
      %s522 = scalar_lea.vmem %s7, %s521
      // Predicated region
      $region57: #{cnn_forward.5} parent=47 // pred_check
        %p523 = pneg %p209
      $region58: #{cnn_forward.5} parent=47 // pred_check_branch
        %525 = sbr.rel (%p523) target = $region60
      $region59: #{cnn_forward.5} parent=47 // pred_region
        _
      $region60: #{cnn_forward.5} parent=47 // pred_fallthru
        _
      // Predicated region
      $region61: #{cnn_forward.5} parent=47 // pred_check
        %p526 = pneg %p209
      $region62: #{cnn_forward.5} parent=47 // pred_check_branch
        %528 = sbr.rel (%p526) target = $region64
      $region63: #{cnn_forward.5} parent=47 // pred_region
        %p529 = scmp.lt.s32.totalorder %s24, 0
        %s530 = scalar_select %p529, %s24, 0
        %s531 = smul.addr %s530, 8
        %s532 = scalar_lea.vmem %s7, %s531
      $region64: #{cnn_forward.5} parent=47 // pred_fallthru
        _
    $region48: #{cnn_forward.5} parent=5 // pred_fallthru
      _
    %p533 = scmp.le.s32.totalorder 2, %s15
    // Predicated region
    $region65: #{cnn_forward.5} parent=5 // pred_check
      %p534 = pneg %p533
    $region66: #{cnn_forward.5} parent=5 // pred_check_branch
      %536 = sbr.rel (%p534) target = $region68
    $region67: #{cnn_forward.5} parent=5 // pred_region
      %s537 = ssub.s32 %s15, 2
    $region68: #{cnn_forward.5} parent=5 // pred_fallthru
      _
  $region6: #{cnn_forward.5} parent=0 // loop_footer
    %s19 = sadd.s32 1, %s15
  $region7: #{cnn_forward.5} parent=0 // loop_footer_branch
    %14 = sbr.rel target = $region3
  $region8: #{cnn_forward.5} parent=0 // loop_exit
    _

</llo_original>
